<compile_context>
chip_gen: v7x
topology: tpu7x:2x2x1
jax: 0.10.0
libtpu: 0.0.40
codegen_flags: <defaults>
</compile_context>

<pallas_src>
import math

import jax
import jax.numpy as jnp
from jax import lax
from jax.experimental import pallas as pl
from jax.experimental.pallas import tpu as pltpu

_LANES = 128


def _round_up8(n):
    return -(-n // 8) * 8


def _slab_layout(input_size, hidden_size, num_classes):
    """Row offsets of the packed parameter slab (sections padded to 8 rows)."""
    g4 = 4 * hidden_size
    r_wih = 0
    r_whh = r_wih + _round_up8(input_size * g4)
    r_b = r_whh + _round_up8(hidden_size * g4)
    r_head = r_b + _round_up8(g4)
    rows_head = hidden_size + 1 + num_classes + 1   # fc1_w.T, fc1_b, fc_w, fc_b
    total = r_head + _round_up8(rows_head)
    return r_wih, r_whh, r_b, r_head, total


# ----------------------------------------------------------------------------
# One-time parameter preparation: transposes, bias fusion, sigmoid-via-tanh
# pre-scaling, lane replication, and packing into a single (R, 128) slab.
# ----------------------------------------------------------------------------
def prepare_params(params):
    wih = jnp.asarray(params["wih"], jnp.float32)          # (4H, I)
    whh = jnp.asarray(params["whh"], jnp.float32)          # (4H, H)
    bias = jnp.asarray(params["bih"] + params["bhh"], jnp.float32)  # (4H,)
    fc1_w = jnp.asarray(params["fc1_w"], jnp.float32)      # (128, H)
    fc1_b = jnp.asarray(params["fc1_b"], jnp.float32)      # (128,)
    fc_w = jnp.asarray(params["fc_w"], jnp.float32)        # (NC, 128)
    fc_b = jnp.asarray(params["fc_b"], jnp.float32)        # (NC,)

    g4, i_sz = wih.shape
    h_sz = whh.shape[1]
    nc = fc_w.shape[0]
    assert fc1_w.shape[0] == _LANES, "module head is Linear(hidden, 128)"

    r_wih, r_whh, r_b, r_head, total = _slab_layout(i_sz, h_sz, nc)

    # sigmoid(x) = 0.5*(1 + tanh(x/2)): pre-scale i/f/o gate rows by 0.5 so the
    # kernel needs a single tanh over the whole gates tile per step.
    # PyTorch gate ordering: i, f, g, o (g is the tanh cell gate -> unscaled).
    scale = jnp.concatenate([jnp.full((h_sz,), 0.5), jnp.full((h_sz,), 0.5),
                             jnp.ones((h_sz,)), jnp.full((h_sz,), 0.5)]
                            ).astype(jnp.float32)                    # (4H,)
    wih_s = wih * scale[:, None]
    whh_s = whh * scale[:, None]
    b_s = bias * scale

    rep = lambda col2d: jnp.broadcast_to(col2d.reshape(-1, 1),
                                         (col2d.size, _LANES))

    slab = jnp.zeros((total, _LANES), jnp.float32)
    slab = slab.at[r_wih:r_wih + i_sz * g4].set(rep(wih_s.T))        # row i*4H+m
    slab = slab.at[r_whh:r_whh + h_sz * g4].set(rep(whh_s.T))        # row j*4H+m
    slab = slab.at[r_b:r_b + g4].set(rep(b_s))
    slab = slab.at[r_head:r_head + h_sz].set(fc1_w.T)                # (H, 128)
    slab = slab.at[r_head + h_sz].set(fc1_b)                         # (128,)
    slab = slab.at[r_head + h_sz + 1:r_head + h_sz + 1 + nc].set(fc_w)
    slab = slab.at[r_head + h_sz + 1 + nc, :nc].set(fc_b)
    return {"slab": slab, "dims": (i_sz, h_sz, nc)}


# ----------------------------------------------------------------------------
# Kernel builder (static sizes captured by closure).
# ----------------------------------------------------------------------------
def _make_kernel(i_sz, h_sz, nc, seq_len, bb):
    g4 = 4 * h_sz
    r_wih, r_whh, r_b, r_head, _ = _slab_layout(i_sz, h_sz, nc)

    def kernel(x_ref, slab_ref, out_ref, gx_ref):
        # ---- unpack the packed parameter slab (static row slices, prologue) --
        wih = slab_ref[r_wih:r_wih + i_sz * g4, :].reshape(i_sz, g4, _LANES)
        whh = slab_ref[r_whh:r_whh + h_sz * g4, :].reshape(h_sz, g4, _LANES)
        bias = slab_ref[r_b:r_b + g4, :]                              # (4H,128)
        fc1w = slab_ref[r_head:r_head + h_sz, :]                      # (H, 128)
        fc1b = slab_ref[r_head + h_sz:r_head + h_sz + 1, :]           # (1, 128)
        fcw = slab_ref[r_head + h_sz + 1:r_head + h_sz + 1 + nc, :]   # (NC,128)
        fcb = slab_ref[r_head + h_sz + 1 + nc:r_head + h_sz + 2 + nc, :]

        # ---- loop-invariant broadcasts hoisted once (no CSE of broadcasts) --
        whh_full = jnp.broadcast_to(whh[:, :, None, :], (h_sz, g4, bb, _LANES))
        wih_full = jnp.broadcast_to(wih[:, :, None, :], (i_sz, g4, bb, _LANES))
        bias_full = jnp.broadcast_to(bias[:, None, :], (g4, bb, _LANES))

        # ---- hoisted input projection for ALL timesteps, stored to VMEM
        # scratch so it is not live (in vregs) across the unrolled recurrence.
        x_all = x_ref[...]                                            # (T,BB,I)
        for t in range(seq_len):
            acc = bias_full
            for i in range(i_sz):
                xb = jnp.broadcast_to(x_all[t, :, i:i + 1], (bb, _LANES))
                acc = acc + xb[None, :, :] * wih_full[i]
            gx_ref[t] = acc                                           # (4H,BB,128)

        # ---- time recurrence: h/c value-carried in a lane-replicated layout;
        # gate extraction & the recurrent FMA are pure major-dim indexing, so
        # there is no cross-lane work on the serial h->h chain.
        # TODO(synk): if T grows, switch to lax.fori_loop(..., unroll=k) over
        # the VMEM-resident gx scratch instead of a fully unrolled Python loop.
        h = jnp.zeros((h_sz, bb, _LANES), jnp.float32)
        c = jnp.zeros((h_sz, bb, _LANES), jnp.float32)
        for t in range(seq_len):
            rec = h[0][None, :, :] * whh_full[0]
            for k in range(1, h_sz):
                rec = rec + h[k][None, :, :] * whh_full[k]
            gates = gx_ref[t] + rec            # (4H,BB,128); i/f/o pre-scaled x0.5
            tg = jnp.tanh(gates)               # single EUP pass for all 4 gates
            i_a = 0.5 * tg[0 * h_sz:1 * h_sz] + 0.5      # sigmoid via tanh
            f_a = 0.5 * tg[1 * h_sz:2 * h_sz] + 0.5
            g_a = tg[2 * h_sz:3 * h_sz]                  # cell gate: plain tanh
            o_a = 0.5 * tg[3 * h_sz:4 * h_sz] + 0.5
            c = f_a * c + i_a * g_a
            h = o_a * jnp.tanh(c)

        # ---- head: relu -> fc_1 -> relu -> fc, all VPU (no MXU on the tail) --
        hn = jnp.maximum(h, 0.0)                          # (H, BB, 128) replicated
        z = hn[0] * jnp.broadcast_to(fc1w[0:1, :], (bb, _LANES))
        for k in range(1, h_sz):
            z = z + hn[k] * jnp.broadcast_to(fc1w[k:k + 1, :], (bb, _LANES))
        z = jnp.maximum(z + jnp.broadcast_to(fc1b, (bb, _LANES)), 0.0)  # (BB,128)

        # final (BB,128)@(128,NC) as multiply + lane reduction per class.
        cols = [jnp.sum(z * jnp.broadcast_to(fcw[j:j + 1, :], (bb, _LANES)),
                        axis=-1, keepdims=True) for j in range(nc)]
        out = cols[0] if nc == 1 else jnp.concatenate(cols, axis=-1)
        # TODO(synk): num_classes=1 forces a 1-lane masked store (module semantics).
        out_ref[...] = out + jnp.broadcast_to(fcb[:, :nc], (bb, nc))

    return kernel


# ----------------------------------------------------------------------------
# Wrapper: grid over batch blocks; weight slab stays VMEM-resident.
# ----------------------------------------------------------------------------
def lstm_forward(x, prepped, *, block_batch=8):
    """x: (B, T, I) float32 (batch_first, like nn.LSTM). Returns (B, NC)."""
    i_sz, h_sz, nc = prepped["dims"]
    slab = prepped["slab"]
    b_total, seq_len, i_x = x.shape
    assert i_x == i_sz
    bb = block_batch
    b_pad = -(-b_total // bb) * bb
    g4 = 4 * h_sz
    rows = slab.shape[0]

    x_tm = jnp.transpose(x, (1, 0, 2)).astype(jnp.float32)       # (T, B, I)
    if b_pad != b_total:
        x_tm = jnp.pad(x_tm, ((0, 0), (0, b_pad - b_total), (0, 0)))

    kernel = _make_kernel(i_sz, h_sz, nc, seq_len, bb)

    out = pl.pallas_call(
        kernel,
        out_shape=jax.ShapeDtypeStruct((b_pad, nc), jnp.float32),
        grid=(b_pad // bb,),
        in_specs=[
            pl.BlockSpec((seq_len, bb, i_sz), lambda g: (0, g, 0)),  # x walks grid
            pl.BlockSpec((rows, _LANES), lambda g: (0, 0)),          # slab resident
        ],
        out_specs=pl.BlockSpec((bb, nc), lambda g: (g, 0)),
        scratch_shapes=[pltpu.VMEM((seq_len, g4, bb, _LANES), jnp.float32)],
        compiler_params=pltpu.CompilerParams(
            dimension_semantics=("parallel",)),                     # v7x: 2 TCs
    )(x_tm, slab)
    return out[:b_total]


# ----------------------------------------------------------------------------
# Pure-JAX reference (mirrors the PyTorch forward exactly) for validation.
# ----------------------------------------------------------------------------
def reference_forward(x, params):
    B, T, I = x.shape
    H = params["whh"].shape[1]
    h = jnp.zeros((B, H), jnp.float32)
    c = jnp.zeros((B, H), jnp.float32)
    b = params["bih"] + params["bhh"]

    def step(carry, x_t):
        h, c = carry
        gates = x_t @ params["wih"].T + h @ params["whh"].T + b
        i_g = jax.nn.sigmoid(gates[:, 0 * H:1 * H])
        f_g = jax.nn.sigmoid(gates[:, 1 * H:2 * H])
        g_g = jnp.tanh(gates[:, 2 * H:3 * H])
        o_g = jax.nn.sigmoid(gates[:, 3 * H:4 * H])
        c_new = f_g * c + i_g * g_g
        h_new = o_g * jnp.tanh(c_new)
        return (h_new, c_new), None

    (h, c), _ = lax.scan(step, (h, c), jnp.transpose(x, (1, 0, 2)))
    out = jnp.maximum(h, 0.0)
    out = jnp.maximum(out @ params["fc1_w"].T + params["fc1_b"], 0.0)
    return out @ params["fc_w"].T + params["fc_b"]


# ----------------------------------------------------------------------------
# Deterministic parameter init (same shapes as nn.LSTM / nn.Linear).
# ----------------------------------------------------------------------------
def init_params(key, input_size, hidden_size, num_classes, fc1_dim=128):
    ks = jax.random.split(key, 8)
    k_lstm = 1.0 / math.sqrt(hidden_size)
    k_fc1 = 1.0 / math.sqrt(hidden_size)
    k_fc = 1.0 / math.sqrt(fc1_dim)
    u = lambda k, shape, s: jax.random.uniform(k, shape, jnp.float32, -s, s)
    return {
        "wih": u(ks[0], (4 * hidden_size, input_size), k_lstm),
        "whh": u(ks[1], (4 * hidden_size, hidden_size), k_lstm),
        "bih": u(ks[2], (4 * hidden_size,), k_lstm),
        "bhh": u(ks[3], (4 * hidden_size,), k_lstm),
        "fc1_w": u(ks[4], (fc1_dim, hidden_size), k_fc1),
        "fc1_b": u(ks[5], (fc1_dim,), k_fc1),
        "fc_w": u(ks[6], (num_classes, fc1_dim), k_fc),
        "fc_b": u(ks[7], (num_classes,), k_fc),
    }


if __name__ == "__main__":
    # Module globals: input_size = 1, hidden_size = 2, num_classes = 1.
    # batch=16 with block_batch=8 -> grid of 2 (weights resident, "parallel").
    batch, seq_len, input_size, hidden_size, num_classes = 16, 8, 1, 2, 1

    key = jax.random.PRNGKey(0)
    k_x, k_p = jax.random.split(key)
    x = jax.random.normal(k_x, (batch, seq_len, input_size), jnp.float32)
    params = init_params(k_p, input_size, hidden_size, num_classes)
    prepped = prepare_params(params)   # one-time weight prep / packing

    out = lstm_forward(x, prepped)
    out = jax.block_until_ready(out)

    ref = reference_forward(x, params)
    assert out.shape == (batch, num_classes)
    assert jnp.allclose(out, ref, atol=1e-4, rtol=1e-4), (out, ref)

    print("KERNEL_OK")
</pallas_src>

<mosaic_0001>
module attributes {stable_mosaic.version = 11 : i64} {
  func.func @kernel(%arg0: i32, %arg1: memref<8x8x1xf32, #tpu.memory_space<vmem>>, %arg2: memref<40x128xf32, #tpu.memory_space<vmem>>, %arg3: memref<8x1xf32, #tpu.memory_space<vmem>>, %arg4: memref<8x8x8x128xf32, #tpu.memory_space<vmem>>) attributes {dimension_semantics = [#tpu.dimension_semantics<parallel>], iteration_bounds = array<i64: 2>, scalar_prefetch = 0 : i64, scratch_operands = 1 : i64, tpu.core_type = #tpu.core_type<tc>, window_params = [{transform_indices = @transform_0, window_bounds = array<i64: 8, 8, 1>}, {pipeline_mode = #tpu.pipeline_mode<synchronous>, transform_indices = @transform_1, window_bounds = array<i64: 40, 128>}, {transform_indices = @transform_2, window_bounds = array<i64: 8, 1>}]} {
    %c0 = arith.constant 0 : index
    %c0_0 = arith.constant 0 : index
    %0 = vector.load %arg2[%c0, %c0_0] : memref<40x128xf32, #tpu.memory_space<vmem>>, vector<8x128xf32>
    %1 = vector.shape_cast %0 : vector<8x128xf32> to vector<1x8x128xf32>
    %c8 = arith.constant 8 : index
    %c0_1 = arith.constant 0 : index
    %2 = vector.load %arg2[%c8, %c0_1] : memref<40x128xf32, #tpu.memory_space<vmem>>, vector<16x128xf32>
    %3 = vector.shape_cast %2 : vector<16x128xf32> to vector<2x8x128xf32>
    %c24 = arith.constant 24 : index
    %c0_2 = arith.constant 0 : index
    %4 = vector.load %arg2[%c24, %c0_2] : memref<40x128xf32, #tpu.memory_space<vmem>>, vector<8x128xf32>
    %c32 = arith.constant 32 : index
    %c0_3 = arith.constant 0 : index
    %5 = vector.load %arg2[%c32, %c0_3] : memref<40x128xf32, #tpu.memory_space<vmem>>, vector<2x128xf32>
    %c34 = arith.constant 34 : index
    %c0_4 = arith.constant 0 : index
    %6 = vector.load %arg2[%c34, %c0_4] : memref<40x128xf32, #tpu.memory_space<vmem>>, vector<1x128xf32>
    %c35 = arith.constant 35 : index
    %c0_5 = arith.constant 0 : index
    %7 = vector.load %arg2[%c35, %c0_5] : memref<40x128xf32, #tpu.memory_space<vmem>>, vector<1x128xf32>
    %c36 = arith.constant 36 : index
    %c0_6 = arith.constant 0 : index
    %8 = vector.load %arg2[%c36, %c0_6] : memref<40x128xf32, #tpu.memory_space<vmem>>, vector<1x128xf32>
    %9 = vector.shape_cast %3 : vector<2x8x128xf32> to vector<2x8x1x128xf32>
    %10 = vector.shape_cast %9 : vector<2x8x1x128xf32> to vector<2x8x1x128xf32>
    %11 = vector.broadcast %10 : vector<2x8x1x128xf32> to vector<2x8x8x128xf32>
    %12 = vector.shape_cast %1 : vector<1x8x128xf32> to vector<1x8x1x128xf32>
    %13 = vector.shape_cast %12 : vector<1x8x1x128xf32> to vector<1x8x1x128xf32>
    %14 = vector.broadcast %13 : vector<1x8x1x128xf32> to vector<1x8x8x128xf32>
    %15 = vector.shape_cast %4 : vector<8x128xf32> to vector<8x1x128xf32>
    %16 = vector.shape_cast %15 : vector<8x1x128xf32> to vector<8x1x128xf32>
    %17 = vector.broadcast %16 : vector<8x1x128xf32> to vector<8x8x128xf32>
    %c0_7 = arith.constant 0 : index
    %c0_8 = arith.constant 0 : index
    %c0_9 = arith.constant 0 : index
    %18 = vector.load %arg1[%c0_7, %c0_8, %c0_9] : memref<8x8x1xf32, #tpu.memory_space<vmem>>, vector<8x8x1xf32>
    %19 = vector.extract_strided_slice %18 {offsets = [0, 0, 0], sizes = [1, 8, 1], strides = [1, 1, 1]} : vector<8x8x1xf32> to vector<1x8x1xf32>
    %20 = vector.shape_cast %19 : vector<1x8x1xf32> to vector<8x1xf32>
    %21 = vector.shape_cast %20 : vector<8x1xf32> to vector<8x1xf32>
    %22 = vector.broadcast %21 : vector<8x1xf32> to vector<8x128xf32>
    %23 = vector.shape_cast %22 : vector<8x128xf32> to vector<1x8x128xf32>
    %24 = vector.shape_cast %14 : vector<1x8x8x128xf32> to vector<8x8x128xf32>
    %25 = vector.broadcast %23 : vector<1x8x128xf32> to vector<8x8x128xf32>
    %26 = arith.mulf %25, %24 : vector<8x8x128xf32>
    %27 = arith.addf %17, %26 : vector<8x8x128xf32>
    %c0_10 = arith.constant 0 : index
    %c0_11 = arith.constant 0 : index
    %c0_12 = arith.constant 0 : index
    %c0_13 = arith.constant 0 : index
    %28 = vector.load %arg4[%c0_10, %c0_11, %c0_12, %c0_13] : memref<8x8x8x128xf32, #tpu.memory_space<vmem>>, vector<1x8x8x128xf32>
    %29 = vector.shape_cast %28 : vector<1x8x8x128xf32> to vector<8x8x128xf32>
    %30 = vector.shape_cast %27 : vector<8x8x128xf32> to vector<1x8x8x128xf32>
    tpu.vector_store %arg4[%c0_10, %c0_11, %c0_12, %c0_13], %30 {strides = array<i32>} : memref<8x8x8x128xf32, #tpu.memory_space<vmem>>, vector<1x8x8x128xf32>,
    %31 = vector.extract_strided_slice %18 {offsets = [1, 0, 0], sizes = [1, 8, 1], strides = [1, 1, 1]} : vector<8x8x1xf32> to vector<1x8x1xf32>
    %32 = vector.shape_cast %31 : vector<1x8x1xf32> to vector<8x1xf32>
    %33 = vector.shape_cast %32 : vector<8x1xf32> to vector<8x1xf32>
    %34 = vector.broadcast %33 : vector<8x1xf32> to vector<8x128xf32>
    %35 = vector.shape_cast %34 : vector<8x128xf32> to vector<1x8x128xf32>
    %36 = vector.shape_cast %14 : vector<1x8x8x128xf32> to vector<8x8x128xf32>
    %37 = vector.broadcast %35 : vector<1x8x128xf32> to vector<8x8x128xf32>
    %38 = arith.mulf %37, %36 : vector<8x8x128xf32>
    %39 = arith.addf %17, %38 : vector<8x8x128xf32>
    %c1 = arith.constant 1 : index
    %c0_14 = arith.constant 0 : index
    %c0_15 = arith.constant 0 : index
    %c0_16 = arith.constant 0 : index
    %40 = vector.load %arg4[%c1, %c0_14, %c0_15, %c0_16] : memref<8x8x8x128xf32, #tpu.memory_space<vmem>>, vector<1x8x8x128xf32>
    %41 = vector.shape_cast %40 : vector<1x8x8x128xf32> to vector<8x8x128xf32>
    %42 = vector.shape_cast %39 : vector<8x8x128xf32> to vector<1x8x8x128xf32>
    tpu.vector_store %arg4[%c1, %c0_14, %c0_15, %c0_16], %42 {strides = array<i32>} : memref<8x8x8x128xf32, #tpu.memory_space<vmem>>, vector<1x8x8x128xf32>,
    %43 = vector.extract_strided_slice %18 {offsets = [2, 0, 0], sizes = [1, 8, 1], strides = [1, 1, 1]} : vector<8x8x1xf32> to vector<1x8x1xf32>
    %44 = vector.shape_cast %43 : vector<1x8x1xf32> to vector<8x1xf32>
    %45 = vector.shape_cast %44 : vector<8x1xf32> to vector<8x1xf32>
    %46 = vector.broadcast %45 : vector<8x1xf32> to vector<8x128xf32>
    %47 = vector.shape_cast %46 : vector<8x128xf32> to vector<1x8x128xf32>
    %48 = vector.shape_cast %14 : vector<1x8x8x128xf32> to vector<8x8x128xf32>
    %49 = vector.broadcast %47 : vector<1x8x128xf32> to vector<8x8x128xf32>
    %50 = arith.mulf %49, %48 : vector<8x8x128xf32>
    %51 = arith.addf %17, %50 : vector<8x8x128xf32>
    %c2 = arith.constant 2 : index
    %c0_17 = arith.constant 0 : index
    %c0_18 = arith.constant 0 : index
    %c0_19 = arith.constant 0 : index
    %52 = vector.load %arg4[%c2, %c0_17, %c0_18, %c0_19] : memref<8x8x8x128xf32, #tpu.memory_space<vmem>>, vector<1x8x8x128xf32>
    %53 = vector.shape_cast %52 : vector<1x8x8x128xf32> to vector<8x8x128xf32>
    %54 = vector.shape_cast %51 : vector<8x8x128xf32> to vector<1x8x8x128xf32>
    tpu.vector_store %arg4[%c2, %c0_17, %c0_18, %c0_19], %54 {strides = array<i32>} : memref<8x8x8x128xf32, #tpu.memory_space<vmem>>, vector<1x8x8x128xf32>,
    %55 = vector.extract_strided_slice %18 {offsets = [3, 0, 0], sizes = [1, 8, 1], strides = [1, 1, 1]} : vector<8x8x1xf32> to vector<1x8x1xf32>
    %56 = vector.shape_cast %55 : vector<1x8x1xf32> to vector<8x1xf32>
    %57 = vector.shape_cast %56 : vector<8x1xf32> to vector<8x1xf32>
    %58 = vector.broadcast %57 : vector<8x1xf32> to vector<8x128xf32>
    %59 = vector.shape_cast %58 : vector<8x128xf32> to vector<1x8x128xf32>
    %60 = vector.shape_cast %14 : vector<1x8x8x128xf32> to vector<8x8x128xf32>
    %61 = vector.broadcast %59 : vector<1x8x128xf32> to vector<8x8x128xf32>
    %62 = arith.mulf %61, %60 : vector<8x8x128xf32>
    %63 = arith.addf %17, %62 : vector<8x8x128xf32>
    %c3 = arith.constant 3 : index
    %c0_20 = arith.constant 0 : index
    %c0_21 = arith.constant 0 : index
    %c0_22 = arith.constant 0 : index
    %64 = vector.load %arg4[%c3, %c0_20, %c0_21, %c0_22] : memref<8x8x8x128xf32, #tpu.memory_space<vmem>>, vector<1x8x8x128xf32>
    %65 = vector.shape_cast %64 : vector<1x8x8x128xf32> to vector<8x8x128xf32>
    %66 = vector.shape_cast %63 : vector<8x8x128xf32> to vector<1x8x8x128xf32>
    tpu.vector_store %arg4[%c3, %c0_20, %c0_21, %c0_22], %66 {strides = array<i32>} : memref<8x8x8x128xf32, #tpu.memory_space<vmem>>, vector<1x8x8x128xf32>,
    %67 = vector.extract_strided_slice %18 {offsets = [4, 0, 0], sizes = [1, 8, 1], strides = [1, 1, 1]} : vector<8x8x1xf32> to vector<1x8x1xf32>
    %68 = vector.shape_cast %67 : vector<1x8x1xf32> to vector<8x1xf32>
    %69 = vector.shape_cast %68 : vector<8x1xf32> to vector<8x1xf32>
    %70 = vector.broadcast %69 : vector<8x1xf32> to vector<8x128xf32>
    %71 = vector.shape_cast %70 : vector<8x128xf32> to vector<1x8x128xf32>
    %72 = vector.shape_cast %14 : vector<1x8x8x128xf32> to vector<8x8x128xf32>
    %73 = vector.broadcast %71 : vector<1x8x128xf32> to vector<8x8x128xf32>
    %74 = arith.mulf %73, %72 : vector<8x8x128xf32>
    %75 = arith.addf %17, %74 : vector<8x8x128xf32>
    %c4 = arith.constant 4 : index
    %c0_23 = arith.constant 0 : index
    %c0_24 = arith.constant 0 : index
    %c0_25 = arith.constant 0 : index
    %76 = vector.load %arg4[%c4, %c0_23, %c0_24, %c0_25] : memref<8x8x8x128xf32, #tpu.memory_space<vmem>>, vector<1x8x8x128xf32>
    %77 = vector.shape_cast %76 : vector<1x8x8x128xf32> to vector<8x8x128xf32>
    %78 = vector.shape_cast %75 : vector<8x8x128xf32> to vector<1x8x8x128xf32>
    tpu.vector_store %arg4[%c4, %c0_23, %c0_24, %c0_25], %78 {strides = array<i32>} : memref<8x8x8x128xf32, #tpu.memory_space<vmem>>, vector<1x8x8x128xf32>,
    %79 = vector.extract_strided_slice %18 {offsets = [5, 0, 0], sizes = [1, 8, 1], strides = [1, 1, 1]} : vector<8x8x1xf32> to vector<1x8x1xf32>
    %80 = vector.shape_cast %79 : vector<1x8x1xf32> to vector<8x1xf32>
    %81 = vector.shape_cast %80 : vector<8x1xf32> to vector<8x1xf32>
    %82 = vector.broadcast %81 : vector<8x1xf32> to vector<8x128xf32>
    %83 = vector.shape_cast %82 : vector<8x128xf32> to vector<1x8x128xf32>
    %84 = vector.shape_cast %14 : vector<1x8x8x128xf32> to vector<8x8x128xf32>
    %85 = vector.broadcast %83 : vector<1x8x128xf32> to vector<8x8x128xf32>
    %86 = arith.mulf %85, %84 : vector<8x8x128xf32>
    %87 = arith.addf %17, %86 : vector<8x8x128xf32>
    %c5 = arith.constant 5 : index
    %c0_26 = arith.constant 0 : index
    %c0_27 = arith.constant 0 : index
    %c0_28 = arith.constant 0 : index
    %88 = vector.load %arg4[%c5, %c0_26, %c0_27, %c0_28] : memref<8x8x8x128xf32, #tpu.memory_space<vmem>>, vector<1x8x8x128xf32>
    %89 = vector.shape_cast %88 : vector<1x8x8x128xf32> to vector<8x8x128xf32>
    %90 = vector.shape_cast %87 : vector<8x8x128xf32> to vector<1x8x8x128xf32>
    tpu.vector_store %arg4[%c5, %c0_26, %c0_27, %c0_28], %90 {strides = array<i32>} : memref<8x8x8x128xf32, #tpu.memory_space<vmem>>, vector<1x8x8x128xf32>,
    %91 = vector.extract_strided_slice %18 {offsets = [6, 0, 0], sizes = [1, 8, 1], strides = [1, 1, 1]} : vector<8x8x1xf32> to vector<1x8x1xf32>
    %92 = vector.shape_cast %91 : vector<1x8x1xf32> to vector<8x1xf32>
    %93 = vector.shape_cast %92 : vector<8x1xf32> to vector<8x1xf32>
    %94 = vector.broadcast %93 : vector<8x1xf32> to vector<8x128xf32>
    %95 = vector.shape_cast %94 : vector<8x128xf32> to vector<1x8x128xf32>
    %96 = vector.shape_cast %14 : vector<1x8x8x128xf32> to vector<8x8x128xf32>
    %97 = vector.broadcast %95 : vector<1x8x128xf32> to vector<8x8x128xf32>
    %98 = arith.mulf %97, %96 : vector<8x8x128xf32>
    %99 = arith.addf %17, %98 : vector<8x8x128xf32>
    %c6 = arith.constant 6 : index
    %c0_29 = arith.constant 0 : index
    %c0_30 = arith.constant 0 : index
    %c0_31 = arith.constant 0 : index
    %100 = vector.load %arg4[%c6, %c0_29, %c0_30, %c0_31] : memref<8x8x8x128xf32, #tpu.memory_space<vmem>>, vector<1x8x8x128xf32>
    %101 = vector.shape_cast %100 : vector<1x8x8x128xf32> to vector<8x8x128xf32>
    %102 = vector.shape_cast %99 : vector<8x8x128xf32> to vector<1x8x8x128xf32>
    tpu.vector_store %arg4[%c6, %c0_29, %c0_30, %c0_31], %102 {strides = array<i32>} : memref<8x8x8x128xf32, #tpu.memory_space<vmem>>, vector<1x8x8x128xf32>,
    %103 = vector.extract_strided_slice %18 {offsets = [7, 0, 0], sizes = [1, 8, 1], strides = [1, 1, 1]} : vector<8x8x1xf32> to vector<1x8x1xf32>
    %104 = vector.shape_cast %103 : vector<1x8x1xf32> to vector<8x1xf32>
    %105 = vector.shape_cast %104 : vector<8x1xf32> to vector<8x1xf32>
    %106 = vector.broadcast %105 : vector<8x1xf32> to vector<8x128xf32>
    %107 = vector.shape_cast %106 : vector<8x128xf32> to vector<1x8x128xf32>
    %108 = vector.shape_cast %14 : vector<1x8x8x128xf32> to vector<8x8x128xf32>
    %109 = vector.broadcast %107 : vector<1x8x128xf32> to vector<8x8x128xf32>
    %110 = arith.mulf %109, %108 : vector<8x8x128xf32>
    %111 = arith.addf %17, %110 : vector<8x8x128xf32>
    %c7 = arith.constant 7 : index
    %c0_32 = arith.constant 0 : index
    %c0_33 = arith.constant 0 : index
    %c0_34 = arith.constant 0 : index
    %112 = vector.load %arg4[%c7, %c0_32, %c0_33, %c0_34] : memref<8x8x8x128xf32, #tpu.memory_space<vmem>>, vector<1x8x8x128xf32>
    %113 = vector.shape_cast %112 : vector<1x8x8x128xf32> to vector<8x8x128xf32>
    %114 = vector.shape_cast %111 : vector<8x8x128xf32> to vector<1x8x8x128xf32>
    tpu.vector_store %arg4[%c7, %c0_32, %c0_33, %c0_34], %114 {strides = array<i32>} : memref<8x8x8x128xf32, #tpu.memory_space<vmem>>, vector<1x8x8x128xf32>,
    %cst = arith.constant 0.000000e+00 : f32
    %115 = vector.broadcast %cst : f32 to vector<2x8x128xf32>
    %cst_35 = arith.constant 0.000000e+00 : f32
    %116 = vector.broadcast %cst_35 : f32 to vector<2x8x128xf32>
    %117 = vector.extract_strided_slice %115 {offsets = [0, 0, 0], sizes = [1, 8, 128], strides = [1, 1, 1]} : vector<2x8x128xf32> to vector<1x8x128xf32>
    %118 = vector.shape_cast %117 : vector<1x8x128xf32> to vector<8x128xf32>
    %119 = vector.shape_cast %118 : vector<8x128xf32> to vector<1x8x128xf32>
    %120 = vector.extract_strided_slice %11 {offsets = [0, 0, 0, 0], sizes = [1, 8, 8, 128], strides = [1, 1, 1, 1]} : vector<2x8x8x128xf32> to vector<1x8x8x128xf32>
    %121 = vector.shape_cast %120 : vector<1x8x8x128xf32> to vector<8x8x128xf32>
    %122 = vector.broadcast %119 : vector<1x8x128xf32> to vector<8x8x128xf32>
    %123 = arith.mulf %122, %121 : vector<8x8x128xf32>
    %124 = vector.extract_strided_slice %115 {offsets = [1, 0, 0], sizes = [1, 8, 128], strides = [1, 1, 1]} : vector<2x8x128xf32> to vector<1x8x128xf32>
    %125 = vector.shape_cast %124 : vector<1x8x128xf32> to vector<8x128xf32>
    %126 = vector.shape_cast %125 : vector<8x128xf32> to vector<1x8x128xf32>
    %127 = vector.extract_strided_slice %11 {offsets = [1, 0, 0, 0], sizes = [1, 8, 8, 128], strides = [1, 1, 1, 1]} : vector<2x8x8x128xf32> to vector<1x8x8x128xf32>
    %128 = vector.shape_cast %127 : vector<1x8x8x128xf32> to vector<8x8x128xf32>
    %129 = vector.broadcast %126 : vector<1x8x128xf32> to vector<8x8x128xf32>
    %130 = arith.mulf %129, %128 : vector<8x8x128xf32>
    %131 = arith.addf %123, %130 : vector<8x8x128xf32>
    %c0_36 = arith.constant 0 : index
    %c0_37 = arith.constant 0 : index
    %c0_38 = arith.constant 0 : index
    %c0_39 = arith.constant 0 : index
    %132 = vector.load %arg4[%c0_36, %c0_37, %c0_38, %c0_39] : memref<8x8x8x128xf32, #tpu.memory_space<vmem>>, vector<1x8x8x128xf32>
    %133 = vector.shape_cast %132 : vector<1x8x8x128xf32> to vector<8x8x128xf32>
    %134 = arith.addf %133, %131 : vector<8x8x128xf32>
    %135 = math.tanh %134 : vector<8x8x128xf32>
    %136 = vector.extract_strided_slice %135 {offsets = [0, 0, 0], sizes = [2, 8, 128], strides = [1, 1, 1]} : vector<8x8x128xf32> to vector<2x8x128xf32>
    %cst_40 = arith.constant 5.000000e-01 : f32
    %137 = vector.broadcast %cst_40 : f32 to vector<2x8x128xf32>
    %138 = arith.mulf %137, %136 : vector<2x8x128xf32>
    %cst_41 = arith.constant 5.000000e-01 : f32
    %139 = vector.broadcast %cst_41 : f32 to vector<2x8x128xf32>
    %140 = arith.addf %138, %139 : vector<2x8x128xf32>
    %141 = vector.extract_strided_slice %135 {offsets = [2, 0, 0], sizes = [2, 8, 128], strides = [1, 1, 1]} : vector<8x8x128xf32> to vector<2x8x128xf32>
    %cst_42 = arith.constant 5.000000e-01 : f32
    %142 = vector.broadcast %cst_42 : f32 to vector<2x8x128xf32>
    %143 = arith.mulf %142, %141 : vector<2x8x128xf32>
    %cst_43 = arith.constant 5.000000e-01 : f32
    %144 = vector.broadcast %cst_43 : f32 to vector<2x8x128xf32>
    %145 = arith.addf %143, %144 : vector<2x8x128xf32>
    %146 = vector.extract_strided_slice %135 {offsets = [4, 0, 0], sizes = [2, 8, 128], strides = [1, 1, 1]} : vector<8x8x128xf32> to vector<2x8x128xf32>
    %147 = vector.extract_strided_slice %135 {offsets = [6, 0, 0], sizes = [2, 8, 128], strides = [1, 1, 1]} : vector<8x8x128xf32> to vector<2x8x128xf32>
    %cst_44 = arith.constant 5.000000e-01 : f32
    %148 = vector.broadcast %cst_44 : f32 to vector<2x8x128xf32>
    %149 = arith.mulf %148, %147 : vector<2x8x128xf32>
    %cst_45 = arith.constant 5.000000e-01 : f32
    %150 = vector.broadcast %cst_45 : f32 to vector<2x8x128xf32>
    %151 = arith.addf %149, %150 : vector<2x8x128xf32>
    %152 = arith.mulf %145, %116 : vector<2x8x128xf32>
    %153 = arith.mulf %140, %146 : vector<2x8x128xf32>
    %154 = arith.addf %152, %153 : vector<2x8x128xf32>
    %155 = math.tanh %154 : vector<2x8x128xf32>
    %156 = arith.mulf %151, %155 : vector<2x8x128xf32>
    %157 = vector.extract_strided_slice %156 {offsets = [0, 0, 0], sizes = [1, 8, 128], strides = [1, 1, 1]} : vector<2x8x128xf32> to vector<1x8x128xf32>
    %158 = vector.shape_cast %157 : vector<1x8x128xf32> to vector<8x128xf32>
    %159 = vector.shape_cast %158 : vector<8x128xf32> to vector<1x8x128xf32>
    %160 = vector.extract_strided_slice %11 {offsets = [0, 0, 0, 0], sizes = [1, 8, 8, 128], strides = [1, 1, 1, 1]} : vector<2x8x8x128xf32> to vector<1x8x8x128xf32>
    %161 = vector.shape_cast %160 : vector<1x8x8x128xf32> to vector<8x8x128xf32>
    %162 = vector.broadcast %159 : vector<1x8x128xf32> to vector<8x8x128xf32>
    %163 = arith.mulf %162, %161 : vector<8x8x128xf32>
    %164 = vector.extract_strided_slice %156 {offsets = [1, 0, 0], sizes = [1, 8, 128], strides = [1, 1, 1]} : vector<2x8x128xf32> to vector<1x8x128xf32>
    %165 = vector.shape_cast %164 : vector<1x8x128xf32> to vector<8x128xf32>
    %166 = vector.shape_cast %165 : vector<8x128xf32> to vector<1x8x128xf32>
    %167 = vector.extract_strided_slice %11 {offsets = [1, 0, 0, 0], sizes = [1, 8, 8, 128], strides = [1, 1, 1, 1]} : vector<2x8x8x128xf32> to vector<1x8x8x128xf32>
    %168 = vector.shape_cast %167 : vector<1x8x8x128xf32> to vector<8x8x128xf32>
    %169 = vector.broadcast %166 : vector<1x8x128xf32> to vector<8x8x128xf32>
    %170 = arith.mulf %169, %168 : vector<8x8x128xf32>
    %171 = arith.addf %163, %170 : vector<8x8x128xf32>
    %c1_46 = arith.constant 1 : index
    %c0_47 = arith.constant 0 : index
    %c0_48 = arith.constant 0 : index
    %c0_49 = arith.constant 0 : index
    %172 = vector.load %arg4[%c1_46, %c0_47, %c0_48, %c0_49] : memref<8x8x8x128xf32, #tpu.memory_space<vmem>>, vector<1x8x8x128xf32>
    %173 = vector.shape_cast %172 : vector<1x8x8x128xf32> to vector<8x8x128xf32>
    %174 = arith.addf %173, %171 : vector<8x8x128xf32>
    %175 = math.tanh %174 : vector<8x8x128xf32>
    %176 = vector.extract_strided_slice %175 {offsets = [0, 0, 0], sizes = [2, 8, 128], strides = [1, 1, 1]} : vector<8x8x128xf32> to vector<2x8x128xf32>
    %cst_50 = arith.constant 5.000000e-01 : f32
    %177 = vector.broadcast %cst_50 : f32 to vector<2x8x128xf32>
    %178 = arith.mulf %177, %176 : vector<2x8x128xf32>
    %cst_51 = arith.constant 5.000000e-01 : f32
    %179 = vector.broadcast %cst_51 : f32 to vector<2x8x128xf32>
    %180 = arith.addf %178, %179 : vector<2x8x128xf32>
    %181 = vector.extract_strided_slice %175 {offsets = [2, 0, 0], sizes = [2, 8, 128], strides = [1, 1, 1]} : vector<8x8x128xf32> to vector<2x8x128xf32>
    %cst_52 = arith.constant 5.000000e-01 : f32
    %182 = vector.broadcast %cst_52 : f32 to vector<2x8x128xf32>
    %183 = arith.mulf %182, %181 : vector<2x8x128xf32>
    %cst_53 = arith.constant 5.000000e-01 : f32
    %184 = vector.broadcast %cst_53 : f32 to vector<2x8x128xf32>
    %185 = arith.addf %183, %184 : vector<2x8x128xf32>
    %186 = vector.extract_strided_slice %175 {offsets = [4, 0, 0], sizes = [2, 8, 128], strides = [1, 1, 1]} : vector<8x8x128xf32> to vector<2x8x128xf32>
    %187 = vector.extract_strided_slice %175 {offsets = [6, 0, 0], sizes = [2, 8, 128], strides = [1, 1, 1]} : vector<8x8x128xf32> to vector<2x8x128xf32>
    %cst_54 = arith.constant 5.000000e-01 : f32
    %188 = vector.broadcast %cst_54 : f32 to vector<2x8x128xf32>
    %189 = arith.mulf %188, %187 : vector<2x8x128xf32>
    %cst_55 = arith.constant 5.000000e-01 : f32
    %190 = vector.broadcast %cst_55 : f32 to vector<2x8x128xf32>
    %191 = arith.addf %189, %190 : vector<2x8x128xf32>
    %192 = arith.mulf %185, %154 : vector<2x8x128xf32>
    %193 = arith.mulf %180, %186 : vector<2x8x128xf32>
    %194 = arith.addf %192, %193 : vector<2x8x128xf32>
    %195 = math.tanh %194 : vector<2x8x128xf32>
    %196 = arith.mulf %191, %195 : vector<2x8x128xf32>
    %197 = vector.extract_strided_slice %196 {offsets = [0, 0, 0], sizes = [1, 8, 128], strides = [1, 1, 1]} : vector<2x8x128xf32> to vector<1x8x128xf32>
    %198 = vector.shape_cast %197 : vector<1x8x128xf32> to vector<8x128xf32>
    %199 = vector.shape_cast %198 : vector<8x128xf32> to vector<1x8x128xf32>
    %200 = vector.extract_strided_slice %11 {offsets = [0, 0, 0, 0], sizes = [1, 8, 8, 128], strides = [1, 1, 1, 1]} : vector<2x8x8x128xf32> to vector<1x8x8x128xf32>
    %201 = vector.shape_cast %200 : vector<1x8x8x128xf32> to vector<8x8x128xf32>
    %202 = vector.broadcast %199 : vector<1x8x128xf32> to vector<8x8x128xf32>
    %203 = arith.mulf %202, %201 : vector<8x8x128xf32>
    %204 = vector.extract_strided_slice %196 {offsets = [1, 0, 0], sizes = [1, 8, 128], strides = [1, 1, 1]} : vector<2x8x128xf32> to vector<1x8x128xf32>
    %205 = vector.shape_cast %204 : vector<1x8x128xf32> to vector<8x128xf32>
    %206 = vector.shape_cast %205 : vector<8x128xf32> to vector<1x8x128xf32>
    %207 = vector.extract_strided_slice %11 {offsets = [1, 0, 0, 0], sizes = [1, 8, 8, 128], strides = [1, 1, 1, 1]} : vector<2x8x8x128xf32> to vector<1x8x8x128xf32>
    %208 = vector.shape_cast %207 : vector<1x8x8x128xf32> to vector<8x8x128xf32>
    %209 = vector.broadcast %206 : vector<1x8x128xf32> to vector<8x8x128xf32>
    %210 = arith.mulf %209, %208 : vector<8x8x128xf32>
    %211 = arith.addf %203, %210 : vector<8x8x128xf32>
    %c2_56 = arith.constant 2 : index
    %c0_57 = arith.constant 0 : index
    %c0_58 = arith.constant 0 : index
    %c0_59 = arith.constant 0 : index
    %212 = vector.load %arg4[%c2_56, %c0_57, %c0_58, %c0_59] : memref<8x8x8x128xf32, #tpu.memory_space<vmem>>, vector<1x8x8x128xf32>
    %213 = vector.shape_cast %212 : vector<1x8x8x128xf32> to vector<8x8x128xf32>
    %214 = arith.addf %213, %211 : vector<8x8x128xf32>
    %215 = math.tanh %214 : vector<8x8x128xf32>
    %216 = vector.extract_strided_slice %215 {offsets = [0, 0, 0], sizes = [2, 8, 128], strides = [1, 1, 1]} : vector<8x8x128xf32> to vector<2x8x128xf32>
    %cst_60 = arith.constant 5.000000e-01 : f32
    %217 = vector.broadcast %cst_60 : f32 to vector<2x8x128xf32>
    %218 = arith.mulf %217, %216 : vector<2x8x128xf32>
    %cst_61 = arith.constant 5.000000e-01 : f32
    %219 = vector.broadcast %cst_61 : f32 to vector<2x8x128xf32>
    %220 = arith.addf %218, %219 : vector<2x8x128xf32>
    %221 = vector.extract_strided_slice %215 {offsets = [2, 0, 0], sizes = [2, 8, 128], strides = [1, 1, 1]} : vector<8x8x128xf32> to vector<2x8x128xf32>
    %cst_62 = arith.constant 5.000000e-01 : f32
    %222 = vector.broadcast %cst_62 : f32 to vector<2x8x128xf32>
    %223 = arith.mulf %222, %221 : vector<2x8x128xf32>
    %cst_63 = arith.constant 5.000000e-01 : f32
    %224 = vector.broadcast %cst_63 : f32 to vector<2x8x128xf32>
    %225 = arith.addf %223, %224 : vector<2x8x128xf32>
    %226 = vector.extract_strided_slice %215 {offsets = [4, 0, 0], sizes = [2, 8, 128], strides = [1, 1, 1]} : vector<8x8x128xf32> to vector<2x8x128xf32>
    %227 = vector.extract_strided_slice %215 {offsets = [6, 0, 0], sizes = [2, 8, 128], strides = [1, 1, 1]} : vector<8x8x128xf32> to vector<2x8x128xf32>
    %cst_64 = arith.constant 5.000000e-01 : f32
    %228 = vector.broadcast %cst_64 : f32 to vector<2x8x128xf32>
    %229 = arith.mulf %228, %227 : vector<2x8x128xf32>
    %cst_65 = arith.constant 5.000000e-01 : f32
    %230 = vector.broadcast %cst_65 : f32 to vector<2x8x128xf32>
    %231 = arith.addf %229, %230 : vector<2x8x128xf32>
    %232 = arith.mulf %225, %194 : vector<2x8x128xf32>
    %233 = arith.mulf %220, %226 : vector<2x8x128xf32>
    %234 = arith.addf %232, %233 : vector<2x8x128xf32>
    %235 = math.tanh %234 : vector<2x8x128xf32>
    %236 = arith.mulf %231, %235 : vector<2x8x128xf32>
    %237 = vector.extract_strided_slice %236 {offsets = [0, 0, 0], sizes = [1, 8, 128], strides = [1, 1, 1]} : vector<2x8x128xf32> to vector<1x8x128xf32>
    %238 = vector.shape_cast %237 : vector<1x8x128xf32> to vector<8x128xf32>
    %239 = vector.shape_cast %238 : vector<8x128xf32> to vector<1x8x128xf32>
    %240 = vector.extract_strided_slice %11 {offsets = [0, 0, 0, 0], sizes = [1, 8, 8, 128], strides = [1, 1, 1, 1]} : vector<2x8x8x128xf32> to vector<1x8x8x128xf32>
    %241 = vector.shape_cast %240 : vector<1x8x8x128xf32> to vector<8x8x128xf32>
    %242 = vector.broadcast %239 : vector<1x8x128xf32> to vector<8x8x128xf32>
    %243 = arith.mulf %242, %241 : vector<8x8x128xf32>
    %244 = vector.extract_strided_slice %236 {offsets = [1, 0, 0], sizes = [1, 8, 128], strides = [1, 1, 1]} : vector<2x8x128xf32> to vector<1x8x128xf32>
    %245 = vector.shape_cast %244 : vector<1x8x128xf32> to vector<8x128xf32>
    %246 = vector.shape_cast %245 : vector<8x128xf32> to vector<1x8x128xf32>
    %247 = vector.extract_strided_slice %11 {offsets = [1, 0, 0, 0], sizes = [1, 8, 8, 128], strides = [1, 1, 1, 1]} : vector<2x8x8x128xf32> to vector<1x8x8x128xf32>
    %248 = vector.shape_cast %247 : vector<1x8x8x128xf32> to vector<8x8x128xf32>
    %249 = vector.broadcast %246 : vector<1x8x128xf32> to vector<8x8x128xf32>
    %250 = arith.mulf %249, %248 : vector<8x8x128xf32>
    %251 = arith.addf %243, %250 : vector<8x8x128xf32>
    %c3_66 = arith.constant 3 : index
    %c0_67 = arith.constant 0 : index
    %c0_68 = arith.constant 0 : index
    %c0_69 = arith.constant 0 : index
    %252 = vector.load %arg4[%c3_66, %c0_67, %c0_68, %c0_69] : memref<8x8x8x128xf32, #tpu.memory_space<vmem>>, vector<1x8x8x128xf32>
    %253 = vector.shape_cast %252 : vector<1x8x8x128xf32> to vector<8x8x128xf32>
    %254 = arith.addf %253, %251 : vector<8x8x128xf32>
    %255 = math.tanh %254 : vector<8x8x128xf32>
    %256 = vector.extract_strided_slice %255 {offsets = [0, 0, 0], sizes = [2, 8, 128], strides = [1, 1, 1]} : vector<8x8x128xf32> to vector<2x8x128xf32>
    %cst_70 = arith.constant 5.000000e-01 : f32
    %257 = vector.broadcast %cst_70 : f32 to vector<2x8x128xf32>
    %258 = arith.mulf %257, %256 : vector<2x8x128xf32>
    %cst_71 = arith.constant 5.000000e-01 : f32
    %259 = vector.broadcast %cst_71 : f32 to vector<2x8x128xf32>
    %260 = arith.addf %258, %259 : vector<2x8x128xf32>
    %261 = vector.extract_strided_slice %255 {offsets = [2, 0, 0], sizes = [2, 8, 128], strides = [1, 1, 1]} : vector<8x8x128xf32> to vector<2x8x128xf32>
    %cst_72 = arith.constant 5.000000e-01 : f32
    %262 = vector.broadcast %cst_72 : f32 to vector<2x8x128xf32>
    %263 = arith.mulf %262, %261 : vector<2x8x128xf32>
    %cst_73 = arith.constant 5.000000e-01 : f32
    %264 = vector.broadcast %cst_73 : f32 to vector<2x8x128xf32>
    %265 = arith.addf %263, %264 : vector<2x8x128xf32>
    %266 = vector.extract_strided_slice %255 {offsets = [4, 0, 0], sizes = [2, 8, 128], strides = [1, 1, 1]} : vector<8x8x128xf32> to vector<2x8x128xf32>
    %267 = vector.extract_strided_slice %255 {offsets = [6, 0, 0], sizes = [2, 8, 128], strides = [1, 1, 1]} : vector<8x8x128xf32> to vector<2x8x128xf32>
    %cst_74 = arith.constant 5.000000e-01 : f32
    %268 = vector.broadcast %cst_74 : f32 to vector<2x8x128xf32>
    %269 = arith.mulf %268, %267 : vector<2x8x128xf32>
    %cst_75 = arith.constant 5.000000e-01 : f32
    %270 = vector.broadcast %cst_75 : f32 to vector<2x8x128xf32>
    %271 = arith.addf %269, %270 : vector<2x8x128xf32>
    %272 = arith.mulf %265, %234 : vector<2x8x128xf32>
    %273 = arith.mulf %260, %266 : vector<2x8x128xf32>
    %274 = arith.addf %272, %273 : vector<2x8x128xf32>
    %275 = math.tanh %274 : vector<2x8x128xf32>
    %276 = arith.mulf %271, %275 : vector<2x8x128xf32>
    %277 = vector.extract_strided_slice %276 {offsets = [0, 0, 0], sizes = [1, 8, 128], strides = [1, 1, 1]} : vector<2x8x128xf32> to vector<1x8x128xf32>
    %278 = vector.shape_cast %277 : vector<1x8x128xf32> to vector<8x128xf32>
    %279 = vector.shape_cast %278 : vector<8x128xf32> to vector<1x8x128xf32>
    %280 = vector.extract_strided_slice %11 {offsets = [0, 0, 0, 0], sizes = [1, 8, 8, 128], strides = [1, 1, 1, 1]} : vector<2x8x8x128xf32> to vector<1x8x8x128xf32>
    %281 = vector.shape_cast %280 : vector<1x8x8x128xf32> to vector<8x8x128xf32>
    %282 = vector.broadcast %279 : vector<1x8x128xf32> to vector<8x8x128xf32>
    %283 = arith.mulf %282, %281 : vector<8x8x128xf32>
    %284 = vector.extract_strided_slice %276 {offsets = [1, 0, 0], sizes = [1, 8, 128], strides = [1, 1, 1]} : vector<2x8x128xf32> to vector<1x8x128xf32>
    %285 = vector.shape_cast %284 : vector<1x8x128xf32> to vector<8x128xf32>
    %286 = vector.shape_cast %285 : vector<8x128xf32> to vector<1x8x128xf32>
    %287 = vector.extract_strided_slice %11 {offsets = [1, 0, 0, 0], sizes = [1, 8, 8, 128], strides = [1, 1, 1, 1]} : vector<2x8x8x128xf32> to vector<1x8x8x128xf32>
    %288 = vector.shape_cast %287 : vector<1x8x8x128xf32> to vector<8x8x128xf32>
    %289 = vector.broadcast %286 : vector<1x8x128xf32> to vector<8x8x128xf32>
    %290 = arith.mulf %289, %288 : vector<8x8x128xf32>
    %291 = arith.addf %283, %290 : vector<8x8x128xf32>
    %c4_76 = arith.constant 4 : index
    %c0_77 = arith.constant 0 : index
    %c0_78 = arith.constant 0 : index
    %c0_79 = arith.constant 0 : index
    %292 = vector.load %arg4[%c4_76, %c0_77, %c0_78, %c0_79] : memref<8x8x8x128xf32, #tpu.memory_space<vmem>>, vector<1x8x8x128xf32>
    %293 = vector.shape_cast %292 : vector<1x8x8x128xf32> to vector<8x8x128xf32>
    %294 = arith.addf %293, %291 : vector<8x8x128xf32>
    %295 = math.tanh %294 : vector<8x8x128xf32>
    %296 = vector.extract_strided_slice %295 {offsets = [0, 0, 0], sizes = [2, 8, 128], strides = [1, 1, 1]} : vector<8x8x128xf32> to vector<2x8x128xf32>
    %cst_80 = arith.constant 5.000000e-01 : f32
    %297 = vector.broadcast %cst_80 : f32 to vector<2x8x128xf32>
    %298 = arith.mulf %297, %296 : vector<2x8x128xf32>
    %cst_81 = arith.constant 5.000000e-01 : f32
    %299 = vector.broadcast %cst_81 : f32 to vector<2x8x128xf32>
    %300 = arith.addf %298, %299 : vector<2x8x128xf32>
    %301 = vector.extract_strided_slice %295 {offsets = [2, 0, 0], sizes = [2, 8, 128], strides = [1, 1, 1]} : vector<8x8x128xf32> to vector<2x8x128xf32>
    %cst_82 = arith.constant 5.000000e-01 : f32
    %302 = vector.broadcast %cst_82 : f32 to vector<2x8x128xf32>
    %303 = arith.mulf %302, %301 : vector<2x8x128xf32>
    %cst_83 = arith.constant 5.000000e-01 : f32
    %304 = vector.broadcast %cst_83 : f32 to vector<2x8x128xf32>
    %305 = arith.addf %303, %304 : vector<2x8x128xf32>
    %306 = vector.extract_strided_slice %295 {offsets = [4, 0, 0], sizes = [2, 8, 128], strides = [1, 1, 1]} : vector<8x8x128xf32> to vector<2x8x128xf32>
    %307 = vector.extract_strided_slice %295 {offsets = [6, 0, 0], sizes = [2, 8, 128], strides = [1, 1, 1]} : vector<8x8x128xf32> to vector<2x8x128xf32>
    %cst_84 = arith.constant 5.000000e-01 : f32
    %308 = vector.broadcast %cst_84 : f32 to vector<2x8x128xf32>
    %309 = arith.mulf %308, %307 : vector<2x8x128xf32>
    %cst_85 = arith.constant 5.000000e-01 : f32
    %310 = vector.broadcast %cst_85 : f32 to vector<2x8x128xf32>
    %311 = arith.addf %309, %310 : vector<2x8x128xf32>
    %312 = arith.mulf %305, %274 : vector<2x8x128xf32>
    %313 = arith.mulf %300, %306 : vector<2x8x128xf32>
    %314 = arith.addf %312, %313 : vector<2x8x128xf32>
    %315 = math.tanh %314 : vector<2x8x128xf32>
    %316 = arith.mulf %311, %315 : vector<2x8x128xf32>
    %317 = vector.extract_strided_slice %316 {offsets = [0, 0, 0], sizes = [1, 8, 128], strides = [1, 1, 1]} : vector<2x8x128xf32> to vector<1x8x128xf32>
    %318 = vector.shape_cast %317 : vector<1x8x128xf32> to vector<8x128xf32>
    %319 = vector.shape_cast %318 : vector<8x128xf32> to vector<1x8x128xf32>
    %320 = vector.extract_strided_slice %11 {offsets = [0, 0, 0, 0], sizes = [1, 8, 8, 128], strides = [1, 1, 1, 1]} : vector<2x8x8x128xf32> to vector<1x8x8x128xf32>
    %321 = vector.shape_cast %320 : vector<1x8x8x128xf32> to vector<8x8x128xf32>
    %322 = vector.broadcast %319 : vector<1x8x128xf32> to vector<8x8x128xf32>
    %323 = arith.mulf %322, %321 : vector<8x8x128xf32>
    %324 = vector.extract_strided_slice %316 {offsets = [1, 0, 0], sizes = [1, 8, 128], strides = [1, 1, 1]} : vector<2x8x128xf32> to vector<1x8x128xf32>
    %325 = vector.shape_cast %324 : vector<1x8x128xf32> to vector<8x128xf32>
    %326 = vector.shape_cast %325 : vector<8x128xf32> to vector<1x8x128xf32>
    %327 = vector.extract_strided_slice %11 {offsets = [1, 0, 0, 0], sizes = [1, 8, 8, 128], strides = [1, 1, 1, 1]} : vector<2x8x8x128xf32> to vector<1x8x8x128xf32>
    %328 = vector.shape_cast %327 : vector<1x8x8x128xf32> to vector<8x8x128xf32>
    %329 = vector.broadcast %326 : vector<1x8x128xf32> to vector<8x8x128xf32>
    %330 = arith.mulf %329, %328 : vector<8x8x128xf32>
    %331 = arith.addf %323, %330 : vector<8x8x128xf32>
    %c5_86 = arith.constant 5 : index
    %c0_87 = arith.constant 0 : index
    %c0_88 = arith.constant 0 : index
    %c0_89 = arith.constant 0 : index
    %332 = vector.load %arg4[%c5_86, %c0_87, %c0_88, %c0_89] : memref<8x8x8x128xf32, #tpu.memory_space<vmem>>, vector<1x8x8x128xf32>
    %333 = vector.shape_cast %332 : vector<1x8x8x128xf32> to vector<8x8x128xf32>
    %334 = arith.addf %333, %331 : vector<8x8x128xf32>
    %335 = math.tanh %334 : vector<8x8x128xf32>
    %336 = vector.extract_strided_slice %335 {offsets = [0, 0, 0], sizes = [2, 8, 128], strides = [1, 1, 1]} : vector<8x8x128xf32> to vector<2x8x128xf32>
    %cst_90 = arith.constant 5.000000e-01 : f32
    %337 = vector.broadcast %cst_90 : f32 to vector<2x8x128xf32>
    %338 = arith.mulf %337, %336 : vector<2x8x128xf32>
    %cst_91 = arith.constant 5.000000e-01 : f32
    %339 = vector.broadcast %cst_91 : f32 to vector<2x8x128xf32>
    %340 = arith.addf %338, %339 : vector<2x8x128xf32>
    %341 = vector.extract_strided_slice %335 {offsets = [2, 0, 0], sizes = [2, 8, 128], strides = [1, 1, 1]} : vector<8x8x128xf32> to vector<2x8x128xf32>
    %cst_92 = arith.constant 5.000000e-01 : f32
    %342 = vector.broadcast %cst_92 : f32 to vector<2x8x128xf32>
    %343 = arith.mulf %342, %341 : vector<2x8x128xf32>
    %cst_93 = arith.constant 5.000000e-01 : f32
    %344 = vector.broadcast %cst_93 : f32 to vector<2x8x128xf32>
    %345 = arith.addf %343, %344 : vector<2x8x128xf32>
    %346 = vector.extract_strided_slice %335 {offsets = [4, 0, 0], sizes = [2, 8, 128], strides = [1, 1, 1]} : vector<8x8x128xf32> to vector<2x8x128xf32>
    %347 = vector.extract_strided_slice %335 {offsets = [6, 0, 0], sizes = [2, 8, 128], strides = [1, 1, 1]} : vector<8x8x128xf32> to vector<2x8x128xf32>
    %cst_94 = arith.constant 5.000000e-01 : f32
    %348 = vector.broadcast %cst_94 : f32 to vector<2x8x128xf32>
    %349 = arith.mulf %348, %347 : vector<2x8x128xf32>
    %cst_95 = arith.constant 5.000000e-01 : f32
    %350 = vector.broadcast %cst_95 : f32 to vector<2x8x128xf32>
    %351 = arith.addf %349, %350 : vector<2x8x128xf32>
    %352 = arith.mulf %345, %314 : vector<2x8x128xf32>
    %353 = arith.mulf %340, %346 : vector<2x8x128xf32>
    %354 = arith.addf %352, %353 : vector<2x8x128xf32>
    %355 = math.tanh %354 : vector<2x8x128xf32>
    %356 = arith.mulf %351, %355 : vector<2x8x128xf32>
    %357 = vector.extract_strided_slice %356 {offsets = [0, 0, 0], sizes = [1, 8, 128], strides = [1, 1, 1]} : vector<2x8x128xf32> to vector<1x8x128xf32>
    %358 = vector.shape_cast %357 : vector<1x8x128xf32> to vector<8x128xf32>
    %359 = vector.shape_cast %358 : vector<8x128xf32> to vector<1x8x128xf32>
    %360 = vector.extract_strided_slice %11 {offsets = [0, 0, 0, 0], sizes = [1, 8, 8, 128], strides = [1, 1, 1, 1]} : vector<2x8x8x128xf32> to vector<1x8x8x128xf32>
    %361 = vector.shape_cast %360 : vector<1x8x8x128xf32> to vector<8x8x128xf32>
    %362 = vector.broadcast %359 : vector<1x8x128xf32> to vector<8x8x128xf32>
    %363 = arith.mulf %362, %361 : vector<8x8x128xf32>
    %364 = vector.extract_strided_slice %356 {offsets = [1, 0, 0], sizes = [1, 8, 128], strides = [1, 1, 1]} : vector<2x8x128xf32> to vector<1x8x128xf32>
    %365 = vector.shape_cast %364 : vector<1x8x128xf32> to vector<8x128xf32>
    %366 = vector.shape_cast %365 : vector<8x128xf32> to vector<1x8x128xf32>
    %367 = vector.extract_strided_slice %11 {offsets = [1, 0, 0, 0], sizes = [1, 8, 8, 128], strides = [1, 1, 1, 1]} : vector<2x8x8x128xf32> to vector<1x8x8x128xf32>
    %368 = vector.shape_cast %367 : vector<1x8x8x128xf32> to vector<8x8x128xf32>
    %369 = vector.broadcast %366 : vector<1x8x128xf32> to vector<8x8x128xf32>
    %370 = arith.mulf %369, %368 : vector<8x8x128xf32>
    %371 = arith.addf %363, %370 : vector<8x8x128xf32>
    %c6_96 = arith.constant 6 : index
    %c0_97 = arith.constant 0 : index
    %c0_98 = arith.constant 0 : index
    %c0_99 = arith.constant 0 : index
    %372 = vector.load %arg4[%c6_96, %c0_97, %c0_98, %c0_99] : memref<8x8x8x128xf32, #tpu.memory_space<vmem>>, vector<1x8x8x128xf32>
    %373 = vector.shape_cast %372 : vector<1x8x8x128xf32> to vector<8x8x128xf32>
    %374 = arith.addf %373, %371 : vector<8x8x128xf32>
    %375 = math.tanh %374 : vector<8x8x128xf32>
    %376 = vector.extract_strided_slice %375 {offsets = [0, 0, 0], sizes = [2, 8, 128], strides = [1, 1, 1]} : vector<8x8x128xf32> to vector<2x8x128xf32>
    %cst_100 = arith.constant 5.000000e-01 : f32
    %377 = vector.broadcast %cst_100 : f32 to vector<2x8x128xf32>
    %378 = arith.mulf %377, %376 : vector<2x8x128xf32>
    %cst_101 = arith.constant 5.000000e-01 : f32
    %379 = vector.broadcast %cst_101 : f32 to vector<2x8x128xf32>
    %380 = arith.addf %378, %379 : vector<2x8x128xf32>
    %381 = vector.extract_strided_slice %375 {offsets = [2, 0, 0], sizes = [2, 8, 128], strides = [1, 1, 1]} : vector<8x8x128xf32> to vector<2x8x128xf32>
    %cst_102 = arith.constant 5.000000e-01 : f32
    %382 = vector.broadcast %cst_102 : f32 to vector<2x8x128xf32>
    %383 = arith.mulf %382, %381 : vector<2x8x128xf32>
    %cst_103 = arith.constant 5.000000e-01 : f32
    %384 = vector.broadcast %cst_103 : f32 to vector<2x8x128xf32>
    %385 = arith.addf %383, %384 : vector<2x8x128xf32>
    %386 = vector.extract_strided_slice %375 {offsets = [4, 0, 0], sizes = [2, 8, 128], strides = [1, 1, 1]} : vector<8x8x128xf32> to vector<2x8x128xf32>
    %387 = vector.extract_strided_slice %375 {offsets = [6, 0, 0], sizes = [2, 8, 128], strides = [1, 1, 1]} : vector<8x8x128xf32> to vector<2x8x128xf32>
    %cst_104 = arith.constant 5.000000e-01 : f32
    %388 = vector.broadcast %cst_104 : f32 to vector<2x8x128xf32>
    %389 = arith.mulf %388, %387 : vector<2x8x128xf32>
    %cst_105 = arith.constant 5.000000e-01 : f32
    %390 = vector.broadcast %cst_105 : f32 to vector<2x8x128xf32>
    %391 = arith.addf %389, %390 : vector<2x8x128xf32>
    %392 = arith.mulf %385, %354 : vector<2x8x128xf32>
    %393 = arith.mulf %380, %386 : vector<2x8x128xf32>
    %394 = arith.addf %392, %393 : vector<2x8x128xf32>
    %395 = math.tanh %394 : vector<2x8x128xf32>
    %396 = arith.mulf %391, %395 : vector<2x8x128xf32>
    %397 = vector.extract_strided_slice %396 {offsets = [0, 0, 0], sizes = [1, 8, 128], strides = [1, 1, 1]} : vector<2x8x128xf32> to vector<1x8x128xf32>
    %398 = vector.shape_cast %397 : vector<1x8x128xf32> to vector<8x128xf32>
    %399 = vector.shape_cast %398 : vector<8x128xf32> to vector<1x8x128xf32>
    %400 = vector.extract_strided_slice %11 {offsets = [0, 0, 0, 0], sizes = [1, 8, 8, 128], strides = [1, 1, 1, 1]} : vector<2x8x8x128xf32> to vector<1x8x8x128xf32>
    %401 = vector.shape_cast %400 : vector<1x8x8x128xf32> to vector<8x8x128xf32>
    %402 = vector.broadcast %399 : vector<1x8x128xf32> to vector<8x8x128xf32>
    %403 = arith.mulf %402, %401 : vector<8x8x128xf32>
    %404 = vector.extract_strided_slice %396 {offsets = [1, 0, 0], sizes = [1, 8, 128], strides = [1, 1, 1]} : vector<2x8x128xf32> to vector<1x8x128xf32>
    %405 = vector.shape_cast %404 : vector<1x8x128xf32> to vector<8x128xf32>
    %406 = vector.shape_cast %405 : vector<8x128xf32> to vector<1x8x128xf32>
    %407 = vector.extract_strided_slice %11 {offsets = [1, 0, 0, 0], sizes = [1, 8, 8, 128], strides = [1, 1, 1, 1]} : vector<2x8x8x128xf32> to vector<1x8x8x128xf32>
    %408 = vector.shape_cast %407 : vector<1x8x8x128xf32> to vector<8x8x128xf32>
    %409 = vector.broadcast %406 : vector<1x8x128xf32> to vector<8x8x128xf32>
    %410 = arith.mulf %409, %408 : vector<8x8x128xf32>
    %411 = arith.addf %403, %410 : vector<8x8x128xf32>
    %c7_106 = arith.constant 7 : index
    %c0_107 = arith.constant 0 : index
    %c0_108 = arith.constant 0 : index
    %c0_109 = arith.constant 0 : index
    %412 = vector.load %arg4[%c7_106, %c0_107, %c0_108, %c0_109] : memref<8x8x8x128xf32, #tpu.memory_space<vmem>>, vector<1x8x8x128xf32>
    %413 = vector.shape_cast %412 : vector<1x8x8x128xf32> to vector<8x8x128xf32>
    %414 = arith.addf %413, %411 : vector<8x8x128xf32>
    %415 = math.tanh %414 : vector<8x8x128xf32>
    %416 = vector.extract_strided_slice %415 {offsets = [0, 0, 0], sizes = [2, 8, 128], strides = [1, 1, 1]} : vector<8x8x128xf32> to vector<2x8x128xf32>
    %cst_110 = arith.constant 5.000000e-01 : f32
    %417 = vector.broadcast %cst_110 : f32 to vector<2x8x128xf32>
    %418 = arith.mulf %417, %416 : vector<2x8x128xf32>
    %cst_111 = arith.constant 5.000000e-01 : f32
    %419 = vector.broadcast %cst_111 : f32 to vector<2x8x128xf32>
    %420 = arith.addf %418, %419 : vector<2x8x128xf32>
    %421 = vector.extract_strided_slice %415 {offsets = [2, 0, 0], sizes = [2, 8, 128], strides = [1, 1, 1]} : vector<8x8x128xf32> to vector<2x8x128xf32>
    %cst_112 = arith.constant 5.000000e-01 : f32
    %422 = vector.broadcast %cst_112 : f32 to vector<2x8x128xf32>
    %423 = arith.mulf %422, %421 : vector<2x8x128xf32>
    %cst_113 = arith.constant 5.000000e-01 : f32
    %424 = vector.broadcast %cst_113 : f32 to vector<2x8x128xf32>
    %425 = arith.addf %423, %424 : vector<2x8x128xf32>
    %426 = vector.extract_strided_slice %415 {offsets = [4, 0, 0], sizes = [2, 8, 128], strides = [1, 1, 1]} : vector<8x8x128xf32> to vector<2x8x128xf32>
    %427 = vector.extract_strided_slice %415 {offsets = [6, 0, 0], sizes = [2, 8, 128], strides = [1, 1, 1]} : vector<8x8x128xf32> to vector<2x8x128xf32>
    %cst_114 = arith.constant 5.000000e-01 : f32
    %428 = vector.broadcast %cst_114 : f32 to vector<2x8x128xf32>
    %429 = arith.mulf %428, %427 : vector<2x8x128xf32>
    %cst_115 = arith.constant 5.000000e-01 : f32
    %430 = vector.broadcast %cst_115 : f32 to vector<2x8x128xf32>
    %431 = arith.addf %429, %430 : vector<2x8x128xf32>
    %432 = arith.mulf %425, %394 : vector<2x8x128xf32>
    %433 = arith.mulf %420, %426 : vector<2x8x128xf32>
    %434 = arith.addf %432, %433 : vector<2x8x128xf32>
    %435 = math.tanh %434 : vector<2x8x128xf32>
    %436 = arith.mulf %431, %435 : vector<2x8x128xf32>
    %cst_116 = arith.constant 0.000000e+00 : f32
    %437 = vector.broadcast %cst_116 : f32 to vector<2x8x128xf32>
    %438 = arith.maximumf %436, %437 : vector<2x8x128xf32>
    %439 = vector.extract_strided_slice %438 {offsets = [0, 0, 0], sizes = [1, 8, 128], strides = [1, 1, 1]} : vector<2x8x128xf32> to vector<1x8x128xf32>
    %440 = vector.shape_cast %439 : vector<1x8x128xf32> to vector<8x128xf32>
    %441 = vector.extract_strided_slice %5 {offsets = [0, 0], sizes = [1, 128], strides = [1, 1]} : vector<2x128xf32> to vector<1x128xf32>
    %442 = vector.shape_cast %441 : vector<1x128xf32> to vector<1x128xf32>
    %443 = vector.broadcast %442 : vector<1x128xf32> to vector<8x128xf32>
    %444 = arith.mulf %440, %443 : vector<8x128xf32>
    %445 = vector.extract_strided_slice %438 {offsets = [1, 0, 0], sizes = [1, 8, 128], strides = [1, 1, 1]} : vector<2x8x128xf32> to vector<1x8x128xf32>
    %446 = vector.shape_cast %445 : vector<1x8x128xf32> to vector<8x128xf32>
    %447 = vector.extract_strided_slice %5 {offsets = [1, 0], sizes = [1, 128], strides = [1, 1]} : vector<2x128xf32> to vector<1x128xf32>
    %448 = vector.shape_cast %447 : vector<1x128xf32> to vector<1x128xf32>
    %449 = vector.broadcast %448 : vector<1x128xf32> to vector<8x128xf32>
    %450 = arith.mulf %446, %449 : vector<8x128xf32>
    %451 = arith.addf %444, %450 : vector<8x128xf32>
    %452 = vector.shape_cast %6 : vector<1x128xf32> to vector<1x128xf32>
    %453 = vector.broadcast %452 : vector<1x128xf32> to vector<8x128xf32>
    %454 = arith.addf %451, %453 : vector<8x128xf32>
    %cst_117 = arith.constant 0.000000e+00 : f32
    %455 = vector.broadcast %cst_117 : f32 to vector<8x128xf32>
    %456 = arith.maximumf %454, %455 : vector<8x128xf32>
    %457 = vector.shape_cast %7 : vector<1x128xf32> to vector<1x128xf32>
    %458 = vector.broadcast %457 : vector<1x128xf32> to vector<8x128xf32>
    %459 = arith.mulf %456, %458 : vector<8x128xf32>
    %cst_118 = arith.constant dense<0.000000e+00> : vector<8xf32>
    %460 = vector.multi_reduction <add>, %459, %cst_118 [1] : vector<8x128xf32> to vector<8xf32>
    %461 = vector.shape_cast %460 : vector<8xf32> to vector<8x1xf32>
    %462 = vector.extract_strided_slice %8 {offsets = [0, 0], sizes = [1, 1], strides = [1, 1]} : vector<1x128xf32> to vector<1x1xf32>
    %463 = vector.shape_cast %462 : vector<1x1xf32> to vector<1x1xf32>
    %464 = vector.broadcast %463 : vector<1x1xf32> to vector<8x1xf32>
    %465 = arith.addf %461, %464 : vector<8x1xf32>
    %c0_119 = arith.constant 0 : index
    %c0_120 = arith.constant 0 : index
    %466 = vector.load %arg3[%c0_119, %c0_120] : memref<8x1xf32, #tpu.memory_space<vmem>>, vector<8x1xf32>
    tpu.vector_store %arg3[%c0_119, %c0_120], %465 {strides = array<i32>} : memref<8x1xf32, #tpu.memory_space<vmem>>, vector<8x1xf32>,
    return
  }
  func.func @transform_0(%arg0: i32) -> (i32, i32, i32) {
    %c0_i32 = arith.constant 0 : i32
    %c0_i32_0 = arith.constant 0 : i32
    %c0_i32_1 = arith.constant 0 : i32
    return %c0_i32, %arg0, %c0_i32_0 : i32, i32, i32
  }
  func.func @transform_1(%arg0: i32) -> (i32, i32) {
    %c0_i32 = arith.constant 0 : i32
    %c0_i32_0 = arith.constant 0 : i32
    %c0_i32_1 = arith.constant 0 : i32
    return %c0_i32, %c0_i32_0 : i32, i32
  }
  func.func @transform_2(%arg0: i32) -> (i32, i32) {
    %c0_i32 = arith.constant 0 : i32
    %c0_i32_0 = arith.constant 0 : i32
    return %arg0, %c0_i32 : i32, i32
  }
}

</mosaic_0001>

<llo_original>
// kernel: tpu_custom_call.1
$region0: #{tpu_custom_call.1}
  #allocation0 [shape = 'u32[]', space=smem, size = 0x4, offset = 0x4, fixed_abs, tag = 'smem constant byte address 0x4 - core index']
  #allocation1 [shape = 'u32[144,128]{1,0:T(1,128)}', space=vmem, size = 0x12000, scoped, tag = 'internal scratch']
  #allocation2 [shape = 'f32[8,8,8,128]{3,2,1,0:T(8,128)}', space=vmem, size = 0x40000, scoped, tag = 'scratch operand']
  %s0 = inlined_call_operand.vmem [shape: f32[8,16,1], index: 0, kind: input, shape index: {}]
  %s1 = inlined_call_operand.vmem [shape: f32[40,128], index: 1, kind: input, shape index: {}]
  %s2 = inlined_call_operand.vmem [shape: f32[16,1], index: 2, kind: output, shape index: {}]
  %s3 = sld [smem:[#allocation0]]
  $region79: #{tpu_custom_call.1} parent=0
    _
  %s5 = ssub.s32 1, %s3
  %s6 = scalar_select 0, %s5, %s3
  $region1: #{tpu_custom_call.1} parent=0
    #allocation3 [shape = 'u8[65536]{0}', space=vmem, size = 0x10000, scoped, tag = 'input window, operand 0']
    loop: start=0, step=1, limit=4
    $region2: #{tpu_custom_call.1} parent=1 // loop_pre_header
      _
    $region3: #{tpu_custom_call.1} parent=1 // loop_header
      %s8 = sphi 0, %s12
      %p9 = scmp.ge.s32.totalorder %s8, 4
      %s18 = sphi 0, %s20
      %s21 = sphi 0, %s18
      %s22 = sphi 0, %s21
      %s38 = sphi 0, %s22
      %s42 = sphi 0, %s42
      %s44 = sphi 0, %s42
      %s45 = sphi 0, %s44
      %s59 = sphi 0, %s45
      %s65 = sphi 0, %s67
      %s68 = sphi 0, %s65
      %s69 = sphi 0, %s68
      %s85 = sphi 0, %s69
    $region4: #{tpu_custom_call.1} parent=1 // loop_header_branch
      %11 = sbr.rel (%p9) target = $region8
    $region5: #{tpu_custom_call.1} parent=1 // loop_body
      %s13 = ssub.s32 %s8, 1
      %s14 = ssub.s32 %s8, 2
      %s15 = sadd.s32 %s8, 1
      %s16 = ssub.s32 %s8, %s15
      %p17 = scmp.eq.s32.totalorder %s16, 0
      %s19 = sadd.s32 %s18, 1
      %s20 = scalar_select %p17, %s18, %s19
      %p23 = pneg %p17
      %p24 = scmp.eq.s32.totalorder %s8, 1
      %p25 = por %p23, %p24
      %p26 = scmp.ne.s32.totalorder %s18, %s21
      %p27 = scmp.eq.s32.totalorder %s8, 0
      %p28 = por %p26, %p27
      %p29 = scmp.ne.s32.totalorder %s18, %s21
      %p30 = scmp.eq.s32.totalorder %s13, 1
      %p31 = por %p29, %p30
      %p32 = scmp.ne.s32.totalorder %s21, %s22
      %p33 = scmp.eq.s32.totalorder %s13, 0
      %p34 = por %p32, %p33
      %p35 = scmp.ne.s32.totalorder %s21, %s22
      %p36 = scmp.eq.s32.totalorder %s14, 1
      %p37 = por %p35, %p36
      %p39 = scmp.ne.s32.totalorder %s22, %s38
      %p40 = scmp.eq.s32.totalorder %s14, 0
      %p41 = por %p39, %p40
      %s43 = sadd.s32 %s42, 1
      %p46 = scmp.eq.s32.totalorder %s8, 1
      %p47 = scmp.ne.s32.totalorder %s42, %s44
      %p48 = scmp.eq.s32.totalorder %s8, 0
      %p49 = por %p47, %p48
      %p50 = scmp.ne.s32.totalorder %s42, %s44
      %p51 = scmp.eq.s32.totalorder %s13, 1
      %p52 = por %p50, %p51
      %p53 = scmp.ne.s32.totalorder %s44, %s45
      %p54 = scmp.eq.s32.totalorder %s13, 0
      %p55 = por %p53, %p54
      %p56 = scmp.ne.s32.totalorder %s44, %s45
      %p57 = scmp.eq.s32.totalorder %s14, 1
      %p58 = por %p56, %p57
      %p60 = scmp.ne.s32.totalorder %s45, %s59
      %p61 = scmp.eq.s32.totalorder %s14, 0
      %p62 = por %p60, %p61
      %s63 = ssub.s32 %s8, %s15
      %p64 = scmp.eq.s32.totalorder %s63, 0
      %s66 = sadd.s32 %s65, 1
      %s67 = scalar_select %p64, %s65, %s66
      %p70 = pneg %p64
      %p71 = scmp.eq.s32.totalorder %s8, 1
      %p72 = por %p70, %p71
      %p73 = scmp.ne.s32.totalorder %s65, %s68
      %p74 = scmp.eq.s32.totalorder %s8, 0
      %p75 = por %p73, %p74
      %p76 = scmp.ne.s32.totalorder %s65, %s68
      %p77 = scmp.eq.s32.totalorder %s13, 1
      %p78 = por %p76, %p77
      %p79 = scmp.ne.s32.totalorder %s68, %s69
      %p80 = scmp.eq.s32.totalorder %s13, 0
      %p81 = por %p79, %p80
      %p82 = scmp.ne.s32.totalorder %s68, %s69
      %p83 = scmp.eq.s32.totalorder %s14, 1
      %p84 = por %p82, %p83
      %p86 = scmp.ne.s32.totalorder %s69, %s85
      %p87 = scmp.eq.s32.totalorder %s14, 0
      %p88 = por %p86, %p87
      %p89 = scmp.le.s32.totalorder 1, %s8
      %p90 = scmp.lt.s32.totalorder %s8, 3
      %p91 = pnand %p89, %p90
      %p92 = pneg %p91
      // Predicated region
      $region9: #{tpu_custom_call.1} parent=5 // pred_check
        _
      $region10: #{tpu_custom_call.1} parent=5 // pred_check_branch
        %94 = sbr.rel (%p91) target = $region12
      $region11: #{tpu_custom_call.1} parent=5 // pred_region
        %s95 = ssub.s32 %s8, 1
        // Predicated region
        $region13: #{tpu_custom_call.1} parent=11 // pred_check
          %p96 = pneg %p55
        $region14: #{tpu_custom_call.1} parent=11 // pred_check_branch
          %98 = sbr.rel (%p96) target = $region16
        $region15: #{tpu_custom_call.1} parent=11 // pred_region
          _
        $region16: #{tpu_custom_call.1} parent=11 // pred_fallthru
          _
      $region12: #{tpu_custom_call.1} parent=5 // pred_fallthru
        _
      %p99 = scmp.lt.s32.totalorder %s8, 2
      // Predicated region
      $region17: #{tpu_custom_call.1} parent=5 // pred_check
        %p100 = pneg %p99
      $region18: #{tpu_custom_call.1} parent=5 // pred_check_branch
        %102 = sbr.rel (%p100) target = $region20
      $region19: #{tpu_custom_call.1} parent=5 // pred_region
        // Predicated region
        $region21: #{tpu_custom_call.1} parent=19 // pred_check
          %p103 = pneg %p28
        $region22: #{tpu_custom_call.1} parent=19 // pred_check_branch
          %105 = sbr.rel (%p103) target = $region24
        $region23: #{tpu_custom_call.1} parent=19 // pred_region
          %s106 = sand.u32 %s18, 1
          %s107 = sand.u32 %s18, 1
          %s108 = smul.addr %s107, 64
          %s109 = scalar_lea.vmem [#allocation3], %s108
          %s110 = smul.addr %s8, 8
          %s111 = scalar_lea.vmem %s0, %s110
          // Predicated region
          $region25: #{tpu_custom_call.1} parent=23 // pred_check
            _
          $region26: #{tpu_custom_call.1} parent=23 // pred_check_branch
            %113 = sbr.rel (0) target = $region28
          $region27: #{tpu_custom_call.1} parent=23 // pred_region
            // Predicated region
            $region29: #{tpu_custom_call.1} parent=27 // pred_check
              _
            $region30: #{tpu_custom_call.1} parent=27 // pred_check_branch
              %115 = sbr.rel (0) target = $region32
            $region31: #{tpu_custom_call.1} parent=27 // pred_region
              // Predicated region
              $region44: #{tpu_custom_call.1} parent=31 // pred_check
                _
              $region45: #{tpu_custom_call.1} parent=31 // pred_check_branch
                %144 = sbr.rel (0) target = $region47
              $region46: #{tpu_custom_call.1} parent=31 // pred_region
                loop: start=0, step=1, limit=1
                $region48: #{tpu_custom_call.1} parent=46 // loop_pre_header
                  _
                $region49: #{tpu_custom_call.1} parent=46 // loop_header
                  %s146 = sphi 0, %s150
                  %p147 = scmp.ge.s32.totalorder %s146, 1
                  %s151 = sphi %s111, %s111
                  %s152 = sphi %s109, %s109
                $region50: #{tpu_custom_call.1} parent=46 // loop_header_branch
                  %149 = sbr.rel (%p147) target = $region54
                $region51: #{tpu_custom_call.1} parent=46 // loop_body
                  %v153 = vld [vmem:[%s151] sm:$0xff]
                  %154 = vst [vmem:[%s152] sm:$0xff] %v153
                  %v155 = vld [vmem:[%s151 + $0x10] sm:$0xff]
                  %156 = vst [vmem:[%s152 + $0x8] sm:$0xff] %v155
                  %v157 = vld [vmem:[%s151 + $0x20] sm:$0xff]
                  %158 = vst [vmem:[%s152 + $0x10] sm:$0xff] %v157
                  %v159 = vld [vmem:[%s151 + $0x30] sm:$0xff]
                  %160 = vst [vmem:[%s152 + $0x18] sm:$0xff] %v159
                  %v161 = vld [vmem:[%s151 + $0x40] sm:$0xff]
                  %162 = vst [vmem:[%s152 + $0x20] sm:$0xff] %v161
                  %v163 = vld [vmem:[%s151 + $0x50] sm:$0xff]
                  %164 = vst [vmem:[%s152 + $0x28] sm:$0xff] %v163
                  %v165 = vld [vmem:[%s151 + $0x60] sm:$0xff]
                  %166 = vst [vmem:[%s152 + $0x30] sm:$0xff] %v165
                  %v167 = vld [vmem:[%s151 + $0x70] sm:$0xff]
                  %168 = vst [vmem:[%s152 + $0x38] sm:$0xff] %v167
                $region52: #{tpu_custom_call.1} parent=46 // loop_footer
                  %s150 = sadd.s32 1, %s146
                $region53: #{tpu_custom_call.1} parent=46 // loop_footer_branch
                  %145 = sbr.rel target = $region49
                $region54: #{tpu_custom_call.1} parent=46 // loop_exit
                  _
              $region47: #{tpu_custom_call.1} parent=31 // pred_fallthru
                _
              // Predicated region
              $region55: #{tpu_custom_call.1} parent=31 // pred_check
                _
              $region56: #{tpu_custom_call.1} parent=31 // pred_check_branch
                %170 = sbr.rel target = $region58
              $region57: #{tpu_custom_call.1} parent=31 // pred_region
                _
              $region58: #{tpu_custom_call.1} parent=31 // pred_fallthru
                _
            $region32: #{tpu_custom_call.1} parent=27 // pred_fallthru
              _
            // Predicated region
            $region33: #{tpu_custom_call.1} parent=27 // pred_check
              _
            $region34: #{tpu_custom_call.1} parent=27 // pred_check_branch
              %117 = sbr.rel target = $region36
            $region35: #{tpu_custom_call.1} parent=27 // pred_region
              loop: start=0, step=1, limit=1
              $region37: #{tpu_custom_call.1} parent=35 // loop_pre_header
                _
              $region38: #{tpu_custom_call.1} parent=35 // loop_header
                %s120 = sphi 0, %s124
                %p121 = scmp.ge.s32.totalorder %s120, 1
                %s125 = sphi %s111, %s111
                %s126 = sphi %s109, %s109
              $region39: #{tpu_custom_call.1} parent=35 // loop_header_branch
                %123 = sbr.rel (%p121) target = $region43
              $region40: #{tpu_custom_call.1} parent=35 // loop_body
                %v127 = vld [vmem:[%s125] sm:$0xff]
                %128 = vst [vmem:[%s126] sm:$0xff] %v127
                %v129 = vld [vmem:[%s125 + $0x10] sm:$0xff]
                %130 = vst [vmem:[%s126 + $0x8] sm:$0xff] %v129
                %v131 = vld [vmem:[%s125 + $0x20] sm:$0xff]
                %132 = vst [vmem:[%s126 + $0x10] sm:$0xff] %v131
                %v133 = vld [vmem:[%s125 + $0x30] sm:$0xff]
                %134 = vst [vmem:[%s126 + $0x18] sm:$0xff] %v133
                %v135 = vld [vmem:[%s125 + $0x40] sm:$0xff]
                %136 = vst [vmem:[%s126 + $0x20] sm:$0xff] %v135
                %v137 = vld [vmem:[%s125 + $0x50] sm:$0xff]
                %138 = vst [vmem:[%s126 + $0x28] sm:$0xff] %v137
                %v139 = vld [vmem:[%s125 + $0x60] sm:$0xff]
                %140 = vst [vmem:[%s126 + $0x30] sm:$0xff] %v139
                %v141 = vld [vmem:[%s125 + $0x70] sm:$0xff]
                %142 = vst [vmem:[%s126 + $0x38] sm:$0xff] %v141
              $region41: #{tpu_custom_call.1} parent=35 // loop_footer
                %s124 = sadd.s32 1, %s120
              $region42: #{tpu_custom_call.1} parent=35 // loop_footer_branch
                %119 = sbr.rel target = $region38
              $region43: #{tpu_custom_call.1} parent=35 // loop_exit
                _
            $region36: #{tpu_custom_call.1} parent=27 // pred_fallthru
              _
          $region28: #{tpu_custom_call.1} parent=23 // pred_fallthru
            _
          %171 = vnop
        $region24: #{tpu_custom_call.1} parent=19 // pred_fallthru
          _
      $region20: #{tpu_custom_call.1} parent=5 // pred_fallthru
        _
      %p172 = scmp.le.s32.totalorder 1, %s8
      %p173 = scmp.lt.s32.totalorder %s8, 3
      %p174 = pnand %p172, %p173
      %p175 = pneg %p174
      // Predicated region
      $region59: #{tpu_custom_call.1} parent=5 // pred_check
        _
      $region60: #{tpu_custom_call.1} parent=5 // pred_check_branch
        %177 = sbr.rel (%p174) target = $region62
      $region61: #{tpu_custom_call.1} parent=5 // pred_region
        %s178 = ssub.s32 %s8, 1
        %s179 = sand.u32 %s21, 1
        %s180 = sand.u32 %s21, 1
        %s181 = smul.addr %s180, 64
        %s182 = scalar_lea.vmem [#allocation3], %s181
        // Predicated region
        $region63: #{tpu_custom_call.1} parent=61 // pred_check
          %p183 = pneg %p34
        $region64: #{tpu_custom_call.1} parent=61 // pred_check_branch
          %185 = sbr.rel (%p183) target = $region66
        $region65: #{tpu_custom_call.1} parent=61 // pred_region
          _
        $region66: #{tpu_custom_call.1} parent=61 // pred_fallthru
          _
        %s186 = sand.u32 %s21, 1
        %s187 = sand.u32 %s21, 1
        %s188 = smul.addr %s187, 64
        %s189 = scalar_lea.vmem [#allocation3], %s188
        %p190 = pneg %p34
        %p191 = pneg %p31
        %p192 = pneg %p55
        %p193 = pneg %p52
        %p194 = pneg %p81
        %p195 = pneg %p78
        %p196 = scmp.lt.s32.totalorder %s13, 1
        %s197 = scalar_select %p196, %s13, 1
        %s198 = smul.addr %s197, 8
        %s199 = scalar_lea.vmem %s2, %s198
        %p200 = scmp.lt.s32.totalorder %s13, 1
        %s201 = scalar_select %p200, %s13, 1
        %s202 = smul.addr %s201, 8
        %s203 = scalar_lea.vmem %s2, %s202
        %v204 = vld [vmem:[%s1] sm:$0xff]
        %v205 = vld [vmem:[%s1 + $0x8] sm:$0xff]
        %v206 = vld [vmem:[%s1 + $0x10] sm:$0xff]
        %v207 = vld [vmem:[%s1 + $0x18] sm:$0xff]
        %v208 = vld [vmem:[%s1 + $0x20] sm:$0x3]
        %v209 = vld [vmem:[%s1 + $0x22] sm:$0x1]
        %v210 = vld [vmem:[%s1 + $0x23] sm:$0x1]
        %v211 = vld [vmem:[%s1 + $0x24] sm:$0x1]
        %v214 = vcombine.high %v205, %v205
        %v216 = vunpack.c.l.s4 1966171168
        %v217 = vunpack.c.0.s8 %v216
        %v218 = vlaneseq
        %v219 = vshrl.u32 %v218, 7
        %v220 = vsub.s32 %v217, %v219
        %v221 = vrot.slane %v205, %v220
        %v223 = vunpack.c.l.s4 1966171168
        %v224 = vunpack.c.0.s8 %v223
        %v225 = vlaneseq
        %v226 = vshrl.u32 %v225, 7
        %v227 = vsub.s32 %v224, %v226
        %v228 = vrot.slane %v214, %v227
        %v229 = vcombine.high %v221, %v221
        %v230 = vcombine.high %v228, %v228
        %v232 = vunpack.c.l.s4 1966171168
        %v233 = vunpack.c.0.s8 %v232
        %v234 = vlaneseq
        %v235 = vshrl.u32 %v234, 7
        %v236 = vsub.s32 %v233, %v235
        %v237 = vrot.slane %v221, %v236
        %v239 = vunpack.c.l.s4 1966171168
        %v240 = vunpack.c.0.s8 %v239
        %v241 = vlaneseq
        %v242 = vshrl.u32 %v241, 7
        %v243 = vsub.s32 %v240, %v242
        %v244 = vrot.slane %v228, %v243
        %v246 = vunpack.c.l.s4 1966171168
        %v247 = vunpack.c.0.s8 %v246
        %v248 = vlaneseq
        %v249 = vshrl.u32 %v248, 7
        %v250 = vsub.s32 %v247, %v249
        %v251 = vrot.slane %v229, %v250
        %v253 = vunpack.c.l.s4 1966171168
        %v254 = vunpack.c.0.s8 %v253
        %v255 = vlaneseq
        %v256 = vshrl.u32 %v255, 7
        %v257 = vsub.s32 %v254, %v256
        %v258 = vrot.slane %v230, %v257
        %v259 = vcombine.high %v237, %v237
        %v260 = vcombine.high %v244, %v244
        %v261 = vcombine.high %v251, %v251
        %v262 = vcombine.high %v258, %v258
        %v263 = vcombine.high %v206, %v206
        %v265 = vunpack.c.l.s4 1966171168
        %v266 = vunpack.c.0.s8 %v265
        %v267 = vlaneseq
        %v268 = vshrl.u32 %v267, 7
        %v269 = vsub.s32 %v266, %v268
        %v270 = vrot.slane %v206, %v269
        %v272 = vunpack.c.l.s4 1966171168
        %v273 = vunpack.c.0.s8 %v272
        %v274 = vlaneseq
        %v275 = vshrl.u32 %v274, 7
        %v276 = vsub.s32 %v273, %v275
        %v277 = vrot.slane %v263, %v276
        %v278 = vcombine.high %v270, %v270
        %v279 = vcombine.high %v277, %v277
        %v281 = vunpack.c.l.s4 1966171168
        %v282 = vunpack.c.0.s8 %v281
        %v283 = vlaneseq
        %v284 = vshrl.u32 %v283, 7
        %v285 = vsub.s32 %v282, %v284
        %v286 = vrot.slane %v270, %v285
        %v288 = vunpack.c.l.s4 1966171168
        %v289 = vunpack.c.0.s8 %v288
        %v290 = vlaneseq
        %v291 = vshrl.u32 %v290, 7
        %v292 = vsub.s32 %v289, %v291
        %v293 = vrot.slane %v277, %v292
        %v295 = vunpack.c.l.s4 1966171168
        %v296 = vunpack.c.0.s8 %v295
        %v297 = vlaneseq
        %v298 = vshrl.u32 %v297, 7
        %v299 = vsub.s32 %v296, %v298
        %v300 = vrot.slane %v278, %v299
        %v302 = vunpack.c.l.s4 1966171168
        %v303 = vunpack.c.0.s8 %v302
        %v304 = vlaneseq
        %v305 = vshrl.u32 %v304, 7
        %v306 = vsub.s32 %v303, %v305
        %v307 = vrot.slane %v279, %v306
        %v308 = vcombine.high %v286, %v286
        %v309 = vcombine.high %v293, %v293
        %v310 = vcombine.high %v300, %v300
        %v311 = vcombine.high %v307, %v307
        %v313 = vcombine.high %v204, %v204
        %v315 = vunpack.c.l.s4 1966171168
        %v316 = vunpack.c.0.s8 %v315
        %v317 = vlaneseq
        %v318 = vshrl.u32 %v317, 7
        %v319 = vsub.s32 %v316, %v318
        %v320 = vrot.slane %v204, %v319
        %v322 = vunpack.c.l.s4 1966171168
        %v323 = vunpack.c.0.s8 %v322
        %v324 = vlaneseq
        %v325 = vshrl.u32 %v324, 7
        %v326 = vsub.s32 %v323, %v325
        %v327 = vrot.slane %v313, %v326
        %v328 = vcombine.high %v320, %v320
        %v329 = vcombine.high %v327, %v327
        %v331 = vunpack.c.l.s4 1966171168
        %v332 = vunpack.c.0.s8 %v331
        %v333 = vlaneseq
        %v334 = vshrl.u32 %v333, 7
        %v335 = vsub.s32 %v332, %v334
        %v336 = vrot.slane %v320, %v335
        %v338 = vunpack.c.l.s4 1966171168
        %v339 = vunpack.c.0.s8 %v338
        %v340 = vlaneseq
        %v341 = vshrl.u32 %v340, 7
        %v342 = vsub.s32 %v339, %v341
        %v343 = vrot.slane %v327, %v342
        %v345 = vunpack.c.l.s4 1966171168
        %v346 = vunpack.c.0.s8 %v345
        %v347 = vlaneseq
        %v348 = vshrl.u32 %v347, 7
        %v349 = vsub.s32 %v346, %v348
        %v350 = vrot.slane %v328, %v349
        %v352 = vunpack.c.l.s4 1966171168
        %v353 = vunpack.c.0.s8 %v352
        %v354 = vlaneseq
        %v355 = vshrl.u32 %v354, 7
        %v356 = vsub.s32 %v353, %v355
        %v357 = vrot.slane %v329, %v356
        %v358 = vcombine.high %v336, %v336
        %v359 = vcombine.high %v343, %v343
        %v360 = vcombine.high %v350, %v350
        %v361 = vcombine.high %v357, %v357
        %v362 = vlaneseq
        %v363 = vshrl.u32 %v362, 7
        %v364 = vsub.s32 0, %v363
        %v365 = vrot.slane %v336, %v364
        %v366 = vlaneseq
        %v367 = vshrl.u32 %v366, 7
        %v368 = vsub.s32 0, %v367
        %v369 = vrot.slane %v350, %v368
        %v370 = vlaneseq
        %v371 = vshrl.u32 %v370, 7
        %v372 = vsub.s32 0, %v371
        %v373 = vrot.slane %v358, %v372
        %v374 = vlaneseq
        %v375 = vshrl.u32 %v374, 7
        %v376 = vsub.s32 0, %v375
        %v377 = vrot.slane %v360, %v376
        %v378 = vlaneseq
        %v379 = vshrl.u32 %v378, 7
        %v380 = vsub.s32 0, %v379
        %v381 = vrot.slane %v343, %v380
        %v382 = vlaneseq
        %v383 = vshrl.u32 %v382, 7
        %v384 = vsub.s32 0, %v383
        %v385 = vrot.slane %v357, %v384
        %v386 = vlaneseq
        %v387 = vshrl.u32 %v386, 7
        %v388 = vsub.s32 0, %v387
        %v389 = vrot.slane %v359, %v388
        %v390 = vlaneseq
        %v391 = vshrl.u32 %v390, 7
        %v392 = vsub.s32 0, %v391
        %v393 = vrot.slane %v361, %v392
        %v403 = vcombine.high %v207, %v207
        %v405 = vunpack.c.l.s4 1966171168
        %v406 = vunpack.c.0.s8 %v405
        %v407 = vlaneseq
        %v408 = vshrl.u32 %v407, 7
        %v409 = vsub.s32 %v406, %v408
        %v410 = vrot.slane %v207, %v409
        %v412 = vunpack.c.l.s4 1966171168
        %v413 = vunpack.c.0.s8 %v412
        %v414 = vlaneseq
        %v415 = vshrl.u32 %v414, 7
        %v416 = vsub.s32 %v413, %v415
        %v417 = vrot.slane %v403, %v416
        %v418 = vcombine.high %v410, %v410
        %v419 = vcombine.high %v417, %v417
        %v421 = vunpack.c.l.s4 1966171168
        %v422 = vunpack.c.0.s8 %v421
        %v423 = vlaneseq
        %v424 = vshrl.u32 %v423, 7
        %v425 = vsub.s32 %v422, %v424
        %v426 = vrot.slane %v410, %v425
        %v428 = vunpack.c.l.s4 1966171168
        %v429 = vunpack.c.0.s8 %v428
        %v430 = vlaneseq
        %v431 = vshrl.u32 %v430, 7
        %v432 = vsub.s32 %v429, %v431
        %v433 = vrot.slane %v417, %v432
        %v435 = vunpack.c.l.s4 1966171168
        %v436 = vunpack.c.0.s8 %v435
        %v437 = vlaneseq
        %v438 = vshrl.u32 %v437, 7
        %v439 = vsub.s32 %v436, %v438
        %v440 = vrot.slane %v418, %v439
        %v442 = vunpack.c.l.s4 1966171168
        %v443 = vunpack.c.0.s8 %v442
        %v444 = vlaneseq
        %v445 = vshrl.u32 %v444, 7
        %v446 = vsub.s32 %v443, %v445
        %v447 = vrot.slane %v419, %v446
        %v448 = vcombine.high %v426, %v426
        %v449 = vcombine.high %v433, %v433
        %v450 = vcombine.high %v440, %v440
        %v451 = vcombine.high %v447, %v447
        %v452 = vlaneseq
        %v453 = vshrl.u32 %v452, 7
        %v454 = vsub.s32 0, %v453
        %v455 = vrot.slane %v426, %v454
        %v456 = vlaneseq
        %v457 = vshrl.u32 %v456, 7
        %v458 = vsub.s32 0, %v457
        %v459 = vrot.slane %v440, %v458
        %v460 = vlaneseq
        %v461 = vshrl.u32 %v460, 7
        %v462 = vsub.s32 0, %v461
        %v463 = vrot.slane %v448, %v462
        %v464 = vlaneseq
        %v465 = vshrl.u32 %v464, 7
        %v466 = vsub.s32 0, %v465
        %v467 = vrot.slane %v450, %v466
        %v468 = vlaneseq
        %v469 = vshrl.u32 %v468, 7
        %v470 = vsub.s32 0, %v469
        %v471 = vrot.slane %v433, %v470
        %v472 = vlaneseq
        %v473 = vshrl.u32 %v472, 7
        %v474 = vsub.s32 0, %v473
        %v475 = vrot.slane %v447, %v474
        %v476 = vlaneseq
        %v477 = vshrl.u32 %v476, 7
        %v478 = vsub.s32 0, %v477
        %v479 = vrot.slane %v449, %v478
        %v480 = vlaneseq
        %v481 = vshrl.u32 %v480, 7
        %v482 = vsub.s32 0, %v481
        %v483 = vrot.slane %v451, %v482
        %v492 = vld [vmem:[%s182] sm:$0xff]
        %v493 = vld [vmem:[%s182 + $0x8] sm:$0xff]
        %v494 = vld [vmem:[%s182 + $0x10] sm:$0xff]
        %v495 = vld [vmem:[%s182 + $0x18] sm:$0xff]
        %v496 = vld [vmem:[%s182 + $0x20] sm:$0xff]
        %v497 = vld [vmem:[%s182 + $0x28] sm:$0xff]
        %v498 = vld [vmem:[%s182 + $0x30] sm:$0xff]
        %v499 = vld [vmem:[%s182 + $0x38] sm:$0xff]
        %501 = vset.pattern.permute.xlu0 0
        %502 = vperm.xlu0 %501, %v492
        %v503 = vpop.permute.xlu0 %502
        %v505 = vmul.f32 %v503, %v365
        %v506 = vmul.f32 %v503, %v369
        %v507 = vmul.f32 %v503, %v373
        %v508 = vmul.f32 %v503, %v377
        %v509 = vmul.f32 %v503, %v381
        %v510 = vmul.f32 %v503, %v385
        %v511 = vmul.f32 %v503, %v389
        %v512 = vmul.f32 %v503, %v393
        %v513 = vadd.f32 %v455, %v505
        %v514 = vadd.f32 %v459, %v506
        %v515 = vadd.f32 %v463, %v507
        %v516 = vadd.f32 %v467, %v508
        %v517 = vadd.f32 %v471, %v509
        %v518 = vadd.f32 %v475, %v510
        %v519 = vadd.f32 %v479, %v511
        %v520 = vadd.f32 %v483, %v512
        %521 = vst [vmem:[#allocation2] sm:$0xff] %v513
        %522 = vst [vmem:[#allocation2 + $0x8] sm:$0xff] %v514
        %523 = vst [vmem:[#allocation2 + $0x10] sm:$0xff] %v515
        %524 = vst [vmem:[#allocation2 + $0x18] sm:$0xff] %v516
        %525 = vst [vmem:[#allocation2 + $0x20] sm:$0xff] %v517
        %526 = vst [vmem:[#allocation2 + $0x28] sm:$0xff] %v518
        %527 = vst [vmem:[#allocation2 + $0x30] sm:$0xff] %v519
        %528 = vst [vmem:[#allocation2 + $0x38] sm:$0xff] %v520
        %530 = vset.pattern.permute.xlu0 0
        %531 = vperm.xlu0 %530, %v493
        %v532 = vpop.permute.xlu0 %531
        %v534 = vmul.f32 %v532, %v365
        %v535 = vmul.f32 %v532, %v369
        %v536 = vmul.f32 %v532, %v373
        %v537 = vmul.f32 %v532, %v377
        %v538 = vmul.f32 %v532, %v381
        %v539 = vmul.f32 %v532, %v385
        %v540 = vmul.f32 %v532, %v389
        %v541 = vmul.f32 %v532, %v393
        %v542 = vadd.f32 %v455, %v534
        %v543 = vadd.f32 %v459, %v535
        %v544 = vadd.f32 %v463, %v536
        %v545 = vadd.f32 %v467, %v537
        %v546 = vadd.f32 %v471, %v538
        %v547 = vadd.f32 %v475, %v539
        %v548 = vadd.f32 %v479, %v540
        %v549 = vadd.f32 %v483, %v541
        %s550 = scalar_lea.vmem [#allocation2], 64
        %551 = vst [vmem:[%s550] sm:$0xff] %v542
        %552 = vst [vmem:[%s550 + $0x8] sm:$0xff] %v543
        %553 = vst [vmem:[%s550 + $0x10] sm:$0xff] %v544
        %554 = vst [vmem:[%s550 + $0x18] sm:$0xff] %v545
        %555 = vst [vmem:[%s550 + $0x20] sm:$0xff] %v546
        %556 = vst [vmem:[%s550 + $0x28] sm:$0xff] %v547
        %557 = vst [vmem:[%s550 + $0x30] sm:$0xff] %v548
        %558 = vst [vmem:[%s550 + $0x38] sm:$0xff] %v549
        %560 = vset.pattern.permute.xlu0 0
        %561 = vperm.xlu0 %560, %v494
        %v562 = vpop.permute.xlu0 %561
        %v564 = vmul.f32 %v562, %v365
        %v565 = vmul.f32 %v562, %v369
        %v566 = vmul.f32 %v562, %v373
        %v567 = vmul.f32 %v562, %v377
        %v568 = vmul.f32 %v562, %v381
        %v569 = vmul.f32 %v562, %v385
        %v570 = vmul.f32 %v562, %v389
        %v571 = vmul.f32 %v562, %v393
        %v572 = vadd.f32 %v455, %v564
        %v573 = vadd.f32 %v459, %v565
        %v574 = vadd.f32 %v463, %v566
        %v575 = vadd.f32 %v467, %v567
        %v576 = vadd.f32 %v471, %v568
        %v577 = vadd.f32 %v475, %v569
        %v578 = vadd.f32 %v479, %v570
        %v579 = vadd.f32 %v483, %v571
        %s580 = scalar_lea.vmem [#allocation2], 128
        %581 = vst [vmem:[%s580] sm:$0xff] %v572
        %582 = vst [vmem:[%s580 + $0x8] sm:$0xff] %v573
        %583 = vst [vmem:[%s580 + $0x10] sm:$0xff] %v574
        %584 = vst [vmem:[%s580 + $0x18] sm:$0xff] %v575
        %585 = vst [vmem:[%s580 + $0x20] sm:$0xff] %v576
        %586 = vst [vmem:[%s580 + $0x28] sm:$0xff] %v577
        %587 = vst [vmem:[%s580 + $0x30] sm:$0xff] %v578
        %588 = vst [vmem:[%s580 + $0x38] sm:$0xff] %v579
        %590 = vset.pattern.permute.xlu0 0
        %591 = vperm.xlu0 %590, %v495
        %v592 = vpop.permute.xlu0 %591
        %v594 = vmul.f32 %v592, %v365
        %v595 = vmul.f32 %v592, %v369
        %v596 = vmul.f32 %v592, %v373
        %v597 = vmul.f32 %v592, %v377
        %v598 = vmul.f32 %v592, %v381
        %v599 = vmul.f32 %v592, %v385
        %v600 = vmul.f32 %v592, %v389
        %v601 = vmul.f32 %v592, %v393
        %v602 = vadd.f32 %v455, %v594
        %v603 = vadd.f32 %v459, %v595
        %v604 = vadd.f32 %v463, %v596
        %v605 = vadd.f32 %v467, %v597
        %v606 = vadd.f32 %v471, %v598
        %v607 = vadd.f32 %v475, %v599
        %v608 = vadd.f32 %v479, %v600
        %v609 = vadd.f32 %v483, %v601
        %s610 = scalar_lea.vmem [#allocation2], 192
        %611 = vst [vmem:[%s610] sm:$0xff] %v602
        %612 = vst [vmem:[%s610 + $0x8] sm:$0xff] %v603
        %613 = vst [vmem:[%s610 + $0x10] sm:$0xff] %v604
        %614 = vst [vmem:[%s610 + $0x18] sm:$0xff] %v605
        %615 = vst [vmem:[%s610 + $0x20] sm:$0xff] %v606
        %616 = vst [vmem:[%s610 + $0x28] sm:$0xff] %v607
        %617 = vst [vmem:[%s610 + $0x30] sm:$0xff] %v608
        %618 = vst [vmem:[%s610 + $0x38] sm:$0xff] %v609
        %620 = vset.pattern.permute.xlu0 0
        %621 = vperm.xlu0 %620, %v496
        %v622 = vpop.permute.xlu0 %621
        %v624 = vmul.f32 %v622, %v365
        %v625 = vmul.f32 %v622, %v369
        %v626 = vmul.f32 %v622, %v373
        %v627 = vmul.f32 %v622, %v377
        %v628 = vmul.f32 %v622, %v381
        %v629 = vmul.f32 %v622, %v385
        %v630 = vmul.f32 %v622, %v389
        %v631 = vmul.f32 %v622, %v393
        %v632 = vadd.f32 %v455, %v624
        %v633 = vadd.f32 %v459, %v625
        %v634 = vadd.f32 %v463, %v626
        %v635 = vadd.f32 %v467, %v627
        %v636 = vadd.f32 %v471, %v628
        %v637 = vadd.f32 %v475, %v629
        %v638 = vadd.f32 %v479, %v630
        %v639 = vadd.f32 %v483, %v631
        %s640 = scalar_lea.vmem [#allocation2], 256
        %641 = vst [vmem:[%s640] sm:$0xff] %v632
        %642 = vst [vmem:[%s640 + $0x8] sm:$0xff] %v633
        %643 = vst [vmem:[%s640 + $0x10] sm:$0xff] %v634
        %644 = vst [vmem:[%s640 + $0x18] sm:$0xff] %v635
        %645 = vst [vmem:[%s640 + $0x20] sm:$0xff] %v636
        %646 = vst [vmem:[%s640 + $0x28] sm:$0xff] %v637
        %647 = vst [vmem:[%s640 + $0x30] sm:$0xff] %v638
        %648 = vst [vmem:[%s640 + $0x38] sm:$0xff] %v639
        %650 = vset.pattern.permute.xlu0 0
        %651 = vperm.xlu0 %650, %v497
        %v652 = vpop.permute.xlu0 %651
        %v654 = vmul.f32 %v652, %v365
        %v655 = vmul.f32 %v652, %v369
        %v656 = vmul.f32 %v652, %v373
        %v657 = vmul.f32 %v652, %v377
        %v658 = vmul.f32 %v652, %v381
        %v659 = vmul.f32 %v652, %v385
        %v660 = vmul.f32 %v652, %v389
        %v661 = vmul.f32 %v652, %v393
        %v662 = vadd.f32 %v455, %v654
        %v663 = vadd.f32 %v459, %v655
        %v664 = vadd.f32 %v463, %v656
        %v665 = vadd.f32 %v467, %v657
        %v666 = vadd.f32 %v471, %v658
        %v667 = vadd.f32 %v475, %v659
        %v668 = vadd.f32 %v479, %v660
        %v669 = vadd.f32 %v483, %v661
        %s670 = scalar_lea.vmem [#allocation2], 320
        %671 = vst [vmem:[%s670] sm:$0xff] %v662
        %672 = vst [vmem:[%s670 + $0x8] sm:$0xff] %v663
        %673 = vst [vmem:[%s670 + $0x10] sm:$0xff] %v664
        %674 = vst [vmem:[%s670 + $0x18] sm:$0xff] %v665
        %675 = vst [vmem:[%s670 + $0x20] sm:$0xff] %v666
        %676 = vst [vmem:[%s670 + $0x28] sm:$0xff] %v667
        %677 = vst [vmem:[%s670 + $0x30] sm:$0xff] %v668
        %678 = vst [vmem:[%s670 + $0x38] sm:$0xff] %v669
        %680 = vset.pattern.permute.xlu0 0
        %681 = vperm.xlu0 %680, %v498
        %v682 = vpop.permute.xlu0 %681
        %v684 = vmul.f32 %v682, %v365
        %v685 = vmul.f32 %v682, %v369
        %v686 = vmul.f32 %v682, %v373
        %v687 = vmul.f32 %v682, %v377
        %v688 = vmul.f32 %v682, %v381
        %v689 = vmul.f32 %v682, %v385
        %v690 = vmul.f32 %v682, %v389
        %v691 = vmul.f32 %v682, %v393
        %v692 = vadd.f32 %v455, %v684
        %v693 = vadd.f32 %v459, %v685
        %v694 = vadd.f32 %v463, %v686
        %v695 = vadd.f32 %v467, %v687
        %v696 = vadd.f32 %v471, %v688
        %v697 = vadd.f32 %v475, %v689
        %v698 = vadd.f32 %v479, %v690
        %v699 = vadd.f32 %v483, %v691
        %s700 = scalar_lea.vmem [#allocation2], 384
        %701 = vst [vmem:[%s700] sm:$0xff] %v692
        %702 = vst [vmem:[%s700 + $0x8] sm:$0xff] %v693
        %703 = vst [vmem:[%s700 + $0x10] sm:$0xff] %v694
        %704 = vst [vmem:[%s700 + $0x18] sm:$0xff] %v695
        %705 = vst [vmem:[%s700 + $0x20] sm:$0xff] %v696
        %706 = vst [vmem:[%s700 + $0x28] sm:$0xff] %v697
        %707 = vst [vmem:[%s700 + $0x30] sm:$0xff] %v698
        %708 = vst [vmem:[%s700 + $0x38] sm:$0xff] %v699
        %710 = vset.pattern.permute.xlu0 0
        %711 = vperm.xlu0 %710, %v499
        %v712 = vpop.permute.xlu0 %711
        %v714 = vmul.f32 %v712, %v365
        %v715 = vmul.f32 %v712, %v369
        %v716 = vmul.f32 %v712, %v373
        %v717 = vmul.f32 %v712, %v377
        %v718 = vmul.f32 %v712, %v381
        %v719 = vmul.f32 %v712, %v385
        %v720 = vmul.f32 %v712, %v389
        %v721 = vmul.f32 %v712, %v393
        %v722 = vadd.f32 %v455, %v714
        %v723 = vadd.f32 %v459, %v715
        %v724 = vadd.f32 %v463, %v716
        %v725 = vadd.f32 %v467, %v717
        %v726 = vadd.f32 %v471, %v718
        %v727 = vadd.f32 %v475, %v719
        %v728 = vadd.f32 %v479, %v720
        %v729 = vadd.f32 %v483, %v721
        %s730 = scalar_lea.vmem [#allocation2], 448
        %731 = vst [vmem:[%s730] sm:$0xff] %v722
        %732 = vst [vmem:[%s730 + $0x8] sm:$0xff] %v723
        %733 = vst [vmem:[%s730 + $0x10] sm:$0xff] %v724
        %734 = vst [vmem:[%s730 + $0x18] sm:$0xff] %v725
        %735 = vst [vmem:[%s730 + $0x20] sm:$0xff] %v726
        %736 = vst [vmem:[%s730 + $0x28] sm:$0xff] %v727
        %737 = vst [vmem:[%s730 + $0x30] sm:$0xff] %v728
        %738 = vst [vmem:[%s730 + $0x38] sm:$0xff] %v729
        %v739 = vlaneseq
        %v740 = vshrl.u32 %v739, 7
        %v741 = vsub.s32 0, %v740
        %v742 = vrot.slane %v237, %v741
        %v743 = vlaneseq
        %v744 = vshrl.u32 %v743, 7
        %v745 = vsub.s32 0, %v744
        %v746 = vrot.slane %v251, %v745
        %v747 = vlaneseq
        %v748 = vshrl.u32 %v747, 7
        %v749 = vsub.s32 0, %v748
        %v750 = vrot.slane %v259, %v749
        %v751 = vlaneseq
        %v752 = vshrl.u32 %v751, 7
        %v753 = vsub.s32 0, %v752
        %v754 = vrot.slane %v261, %v753
        %v755 = vlaneseq
        %v756 = vshrl.u32 %v755, 7
        %v757 = vsub.s32 0, %v756
        %v758 = vrot.slane %v244, %v757
        %v759 = vlaneseq
        %v760 = vshrl.u32 %v759, 7
        %v761 = vsub.s32 0, %v760
        %v762 = vrot.slane %v258, %v761
        %v763 = vlaneseq
        %v764 = vshrl.u32 %v763, 7
        %v765 = vsub.s32 0, %v764
        %v766 = vrot.slane %v260, %v765
        %v767 = vlaneseq
        %v768 = vshrl.u32 %v767, 7
        %v769 = vsub.s32 0, %v768
        %v770 = vrot.slane %v262, %v769
        %v779 = vmul.f32 %v742, 0.0
        %v780 = vmul.f32 %v746, 0.0
        %v781 = vmul.f32 %v750, 0.0
        %v782 = vmul.f32 %v754, 0.0
        %v783 = vmul.f32 %v758, 0.0
        %v784 = vmul.f32 %v762, 0.0
        %v785 = vmul.f32 %v766, 0.0
        %v786 = vmul.f32 %v770, 0.0
        %v787 = vlaneseq
        %v788 = vshrl.u32 %v787, 7
        %v789 = vsub.s32 0, %v788
        %v790 = vrot.slane %v286, %v789
        %v791 = vlaneseq
        %v792 = vshrl.u32 %v791, 7
        %v793 = vsub.s32 0, %v792
        %v794 = vrot.slane %v300, %v793
        %v795 = vlaneseq
        %v796 = vshrl.u32 %v795, 7
        %v797 = vsub.s32 0, %v796
        %v798 = vrot.slane %v308, %v797
        %v799 = vlaneseq
        %v800 = vshrl.u32 %v799, 7
        %v801 = vsub.s32 0, %v800
        %v802 = vrot.slane %v310, %v801
        %v803 = vlaneseq
        %v804 = vshrl.u32 %v803, 7
        %v805 = vsub.s32 0, %v804
        %v806 = vrot.slane %v293, %v805
        %v807 = vlaneseq
        %v808 = vshrl.u32 %v807, 7
        %v809 = vsub.s32 0, %v808
        %v810 = vrot.slane %v307, %v809
        %v811 = vlaneseq
        %v812 = vshrl.u32 %v811, 7
        %v813 = vsub.s32 0, %v812
        %v814 = vrot.slane %v309, %v813
        %v815 = vlaneseq
        %v816 = vshrl.u32 %v815, 7
        %v817 = vsub.s32 0, %v816
        %v818 = vrot.slane %v311, %v817
        %v827 = vmul.f32 %v790, 0.0
        %v828 = vmul.f32 %v794, 0.0
        %v829 = vmul.f32 %v798, 0.0
        %v830 = vmul.f32 %v802, 0.0
        %v831 = vmul.f32 %v806, 0.0
        %v832 = vmul.f32 %v810, 0.0
        %v833 = vmul.f32 %v814, 0.0
        %v834 = vmul.f32 %v818, 0.0
        %v835 = vadd.f32 %v779, %v827
        %v836 = vadd.f32 %v780, %v828
        %v837 = vadd.f32 %v781, %v829
        %v838 = vadd.f32 %v782, %v830
        %v839 = vadd.f32 %v783, %v831
        %v840 = vadd.f32 %v784, %v832
        %v841 = vadd.f32 %v785, %v833
        %v842 = vadd.f32 %v786, %v834
        %v843 = vld [vmem:[#allocation2] sm:$0xff]
        %v844 = vld [vmem:[#allocation2 + $0x8] sm:$0xff]
        %v845 = vld [vmem:[#allocation2 + $0x10] sm:$0xff]
        %v846 = vld [vmem:[#allocation2 + $0x18] sm:$0xff]
        %v847 = vld [vmem:[#allocation2 + $0x20] sm:$0xff]
        %v848 = vld [vmem:[#allocation2 + $0x28] sm:$0xff]
        %v849 = vld [vmem:[#allocation2 + $0x30] sm:$0xff]
        %v850 = vld [vmem:[#allocation2 + $0x38] sm:$0xff]
        %v851 = vadd.f32 %v843, %v835
        %v852 = vadd.f32 %v844, %v836
        %v853 = vadd.f32 %v845, %v837
        %v854 = vadd.f32 %v846, %v838
        %v855 = vadd.f32 %v847, %v839
        %v856 = vadd.f32 %v848, %v840
        %v857 = vadd.f32 %v849, %v841
        %v858 = vadd.f32 %v850, %v842
        %v859 = vtanh.pop %v851
        %v860 = vtanh.pop %v852
        %v861 = vtanh.pop %v853
        %v862 = vtanh.pop %v854
        %v863 = vtanh.pop %v855
        %v864 = vtanh.pop %v856
        %v865 = vtanh.pop %v857
        %v866 = vtanh.pop %v858
        %v867 = vmul.f32 %v859, 0.5
        %v868 = vmul.f32 %v860, 0.5
        %v869 = vadd.f32 %v867, 0.5
        %v870 = vadd.f32 %v868, 0.5
        %v871 = vmul.f32 %v861, 0.5
        %v872 = vmul.f32 %v862, 0.5
        %v873 = vadd.f32 %v871, 0.5
        %v874 = vadd.f32 %v872, 0.5
        %v875 = vmul.f32 %v865, 0.5
        %v876 = vmul.f32 %v866, 0.5
        %v877 = vadd.f32 %v875, 0.5
        %v878 = vadd.f32 %v876, 0.5
        %v879 = vmul.f32 %v873, 0.0
        %v880 = vmul.f32 %v874, 0.0
        %v881 = vmul.f32 %v869, %v863
        %v882 = vmul.f32 %v870, %v864
        %v883 = vadd.f32 %v879, %v881
        %v884 = vadd.f32 %v880, %v882
        %v885 = vtanh.pop %v883
        %v886 = vtanh.pop %v884
        %v887 = vmul.f32 %v877, %v885
        %v888 = vmul.f32 %v878, %v886
        %v889 = vmul.f32 %v887, %v742
        %v890 = vmul.f32 %v887, %v746
        %v891 = vmul.f32 %v887, %v750
        %v892 = vmul.f32 %v887, %v754
        %v893 = vmul.f32 %v887, %v758
        %v894 = vmul.f32 %v887, %v762
        %v895 = vmul.f32 %v887, %v766
        %v896 = vmul.f32 %v887, %v770
        %v897 = vmul.f32 %v888, %v790
        %v898 = vmul.f32 %v888, %v794
        %v899 = vmul.f32 %v888, %v798
        %v900 = vmul.f32 %v888, %v802
        %v901 = vmul.f32 %v888, %v806
        %v902 = vmul.f32 %v888, %v810
        %v903 = vmul.f32 %v888, %v814
        %v904 = vmul.f32 %v888, %v818
        %v905 = vadd.f32 %v889, %v897
        %v906 = vadd.f32 %v890, %v898
        %v907 = vadd.f32 %v891, %v899
        %v908 = vadd.f32 %v892, %v900
        %v909 = vadd.f32 %v893, %v901
        %v910 = vadd.f32 %v894, %v902
        %v911 = vadd.f32 %v895, %v903
        %v912 = vadd.f32 %v896, %v904
        %v913 = vld [vmem:[%s550] sm:$0xff]
        %v914 = vld [vmem:[%s550 + $0x8] sm:$0xff]
        %v915 = vld [vmem:[%s550 + $0x10] sm:$0xff]
        %v916 = vld [vmem:[%s550 + $0x18] sm:$0xff]
        %v917 = vld [vmem:[%s550 + $0x20] sm:$0xff]
        %v918 = vld [vmem:[%s550 + $0x28] sm:$0xff]
        %v919 = vld [vmem:[%s550 + $0x30] sm:$0xff]
        %v920 = vld [vmem:[%s550 + $0x38] sm:$0xff]
        %v921 = vadd.f32 %v913, %v905
        %v922 = vadd.f32 %v914, %v906
        %v923 = vadd.f32 %v915, %v907
        %v924 = vadd.f32 %v916, %v908
        %v925 = vadd.f32 %v917, %v909
        %v926 = vadd.f32 %v918, %v910
        %v927 = vadd.f32 %v919, %v911
        %v928 = vadd.f32 %v920, %v912
        %v929 = vtanh.pop %v921
        %v930 = vtanh.pop %v922
        %v931 = vtanh.pop %v923
        %v932 = vtanh.pop %v924
        %v933 = vtanh.pop %v925
        %v934 = vtanh.pop %v926
        %v935 = vtanh.pop %v927
        %v936 = vtanh.pop %v928
        %v937 = vmul.f32 %v929, 0.5
        %v938 = vmul.f32 %v930, 0.5
        %v939 = vadd.f32 %v937, 0.5
        %v940 = vadd.f32 %v938, 0.5
        %v941 = vmul.f32 %v931, 0.5
        %v942 = vmul.f32 %v932, 0.5
        %v943 = vadd.f32 %v941, 0.5
        %v944 = vadd.f32 %v942, 0.5
        %v945 = vmul.f32 %v935, 0.5
        %v946 = vmul.f32 %v936, 0.5
        %v947 = vadd.f32 %v945, 0.5
        %v948 = vadd.f32 %v946, 0.5
        %v949 = vmul.f32 %v943, %v883
        %v950 = vmul.f32 %v944, %v884
        %v951 = vmul.f32 %v939, %v933
        %v952 = vmul.f32 %v940, %v934
        %v953 = vadd.f32 %v949, %v951
        %v954 = vadd.f32 %v950, %v952
        %v955 = vtanh.pop %v953
        %v956 = vtanh.pop %v954
        %v957 = vmul.f32 %v947, %v955
        %v958 = vmul.f32 %v948, %v956
        %v959 = vmul.f32 %v957, %v742
        %v960 = vmul.f32 %v957, %v746
        %v961 = vmul.f32 %v957, %v750
        %v962 = vmul.f32 %v957, %v754
        %v963 = vmul.f32 %v957, %v758
        %v964 = vmul.f32 %v957, %v762
        %v965 = vmul.f32 %v957, %v766
        %v966 = vmul.f32 %v957, %v770
        %v967 = vmul.f32 %v958, %v790
        %v968 = vmul.f32 %v958, %v794
        %v969 = vmul.f32 %v958, %v798
        %v970 = vmul.f32 %v958, %v802
        %v971 = vmul.f32 %v958, %v806
        %v972 = vmul.f32 %v958, %v810
        %v973 = vmul.f32 %v958, %v814
        %v974 = vmul.f32 %v958, %v818
        %v975 = vadd.f32 %v959, %v967
        %v976 = vadd.f32 %v960, %v968
        %v977 = vadd.f32 %v961, %v969
        %v978 = vadd.f32 %v962, %v970
        %v979 = vadd.f32 %v963, %v971
        %v980 = vadd.f32 %v964, %v972
        %v981 = vadd.f32 %v965, %v973
        %v982 = vadd.f32 %v966, %v974
        %v983 = vld [vmem:[%s580] sm:$0xff]
        %v984 = vld [vmem:[%s580 + $0x8] sm:$0xff]
        %v985 = vld [vmem:[%s580 + $0x10] sm:$0xff]
        %v986 = vld [vmem:[%s580 + $0x18] sm:$0xff]
        %v987 = vld [vmem:[%s580 + $0x20] sm:$0xff]
        %v988 = vld [vmem:[%s580 + $0x28] sm:$0xff]
        %v989 = vld [vmem:[%s580 + $0x30] sm:$0xff]
        %v990 = vld [vmem:[%s580 + $0x38] sm:$0xff]
        %v991 = vadd.f32 %v983, %v975
        %v992 = vadd.f32 %v984, %v976
        %v993 = vadd.f32 %v985, %v977
        %v994 = vadd.f32 %v986, %v978
        %v995 = vadd.f32 %v987, %v979
        %v996 = vadd.f32 %v988, %v980
        %v997 = vadd.f32 %v989, %v981
        %v998 = vadd.f32 %v990, %v982
        %v999 = vtanh.pop %v991
        %v1000 = vtanh.pop %v992
        %v1001 = vtanh.pop %v993
        %v1002 = vtanh.pop %v994
        %v1003 = vtanh.pop %v995
        %v1004 = vtanh.pop %v996
        %v1005 = vtanh.pop %v997
        %v1006 = vtanh.pop %v998
        %v1007 = vmul.f32 %v999, 0.5
        %v1008 = vmul.f32 %v1000, 0.5
        %v1009 = vadd.f32 %v1007, 0.5
        %v1010 = vadd.f32 %v1008, 0.5
        %v1011 = vmul.f32 %v1001, 0.5
        %v1012 = vmul.f32 %v1002, 0.5
        %v1013 = vadd.f32 %v1011, 0.5
        %v1014 = vadd.f32 %v1012, 0.5
        %v1015 = vmul.f32 %v1005, 0.5
        %v1016 = vmul.f32 %v1006, 0.5
        %v1017 = vadd.f32 %v1015, 0.5
        %v1018 = vadd.f32 %v1016, 0.5
        %v1019 = vmul.f32 %v1013, %v953
        %v1020 = vmul.f32 %v1014, %v954
        %v1021 = vmul.f32 %v1009, %v1003
        %v1022 = vmul.f32 %v1010, %v1004
        %v1023 = vadd.f32 %v1019, %v1021
        %v1024 = vadd.f32 %v1020, %v1022
        %v1025 = vtanh.pop %v1023
        %v1026 = vtanh.pop %v1024
        %v1027 = vmul.f32 %v1017, %v1025
        %v1028 = vmul.f32 %v1018, %v1026
        %v1029 = vmul.f32 %v1027, %v742
        %v1030 = vmul.f32 %v1027, %v746
        %v1031 = vmul.f32 %v1027, %v750
        %v1032 = vmul.f32 %v1027, %v754
        %v1033 = vmul.f32 %v1027, %v758
        %v1034 = vmul.f32 %v1027, %v762
        %v1035 = vmul.f32 %v1027, %v766
        %v1036 = vmul.f32 %v1027, %v770
        %v1037 = vmul.f32 %v1028, %v790
        %v1038 = vmul.f32 %v1028, %v794
        %v1039 = vmul.f32 %v1028, %v798
        %v1040 = vmul.f32 %v1028, %v802
        %v1041 = vmul.f32 %v1028, %v806
        %v1042 = vmul.f32 %v1028, %v810
        %v1043 = vmul.f32 %v1028, %v814
        %v1044 = vmul.f32 %v1028, %v818
        %v1045 = vadd.f32 %v1029, %v1037
        %v1046 = vadd.f32 %v1030, %v1038
        %v1047 = vadd.f32 %v1031, %v1039
        %v1048 = vadd.f32 %v1032, %v1040
        %v1049 = vadd.f32 %v1033, %v1041
        %v1050 = vadd.f32 %v1034, %v1042
        %v1051 = vadd.f32 %v1035, %v1043
        %v1052 = vadd.f32 %v1036, %v1044
        %v1053 = vld [vmem:[%s610] sm:$0xff]
        %v1054 = vld [vmem:[%s610 + $0x8] sm:$0xff]
        %v1055 = vld [vmem:[%s610 + $0x10] sm:$0xff]
        %v1056 = vld [vmem:[%s610 + $0x18] sm:$0xff]
        %v1057 = vld [vmem:[%s610 + $0x20] sm:$0xff]
        %v1058 = vld [vmem:[%s610 + $0x28] sm:$0xff]
        %v1059 = vld [vmem:[%s610 + $0x30] sm:$0xff]
        %v1060 = vld [vmem:[%s610 + $0x38] sm:$0xff]
        %v1061 = vadd.f32 %v1053, %v1045
        %v1062 = vadd.f32 %v1054, %v1046
        %v1063 = vadd.f32 %v1055, %v1047
        %v1064 = vadd.f32 %v1056, %v1048
        %v1065 = vadd.f32 %v1057, %v1049
        %v1066 = vadd.f32 %v1058, %v1050
        %v1067 = vadd.f32 %v1059, %v1051
        %v1068 = vadd.f32 %v1060, %v1052
        %v1069 = vtanh.pop %v1061
        %v1070 = vtanh.pop %v1062
        %v1071 = vtanh.pop %v1063
        %v1072 = vtanh.pop %v1064
        %v1073 = vtanh.pop %v1065
        %v1074 = vtanh.pop %v1066
        %v1075 = vtanh.pop %v1067
        %v1076 = vtanh.pop %v1068
        %v1077 = vmul.f32 %v1069, 0.5
        %v1078 = vmul.f32 %v1070, 0.5
        %v1079 = vadd.f32 %v1077, 0.5
        %v1080 = vadd.f32 %v1078, 0.5
        %v1081 = vmul.f32 %v1071, 0.5
        %v1082 = vmul.f32 %v1072, 0.5
        %v1083 = vadd.f32 %v1081, 0.5
        %v1084 = vadd.f32 %v1082, 0.5
        %v1085 = vmul.f32 %v1075, 0.5
        %v1086 = vmul.f32 %v1076, 0.5
        %v1087 = vadd.f32 %v1085, 0.5
        %v1088 = vadd.f32 %v1086, 0.5
        %v1089 = vmul.f32 %v1083, %v1023
        %v1090 = vmul.f32 %v1084, %v1024
        %v1091 = vmul.f32 %v1079, %v1073
        %v1092 = vmul.f32 %v1080, %v1074
        %v1093 = vadd.f32 %v1089, %v1091
        %v1094 = vadd.f32 %v1090, %v1092
        %v1095 = vtanh.pop %v1093
        %v1096 = vtanh.pop %v1094
        %v1097 = vmul.f32 %v1087, %v1095
        %v1098 = vmul.f32 %v1088, %v1096
        %v1099 = vmul.f32 %v1097, %v742
        %v1100 = vmul.f32 %v1097, %v746
        %v1101 = vmul.f32 %v1097, %v750
        %v1102 = vmul.f32 %v1097, %v754
        %v1103 = vmul.f32 %v1097, %v758
        %v1104 = vmul.f32 %v1097, %v762
        %v1105 = vmul.f32 %v1097, %v766
        %v1106 = vmul.f32 %v1097, %v770
        %v1107 = vmul.f32 %v1098, %v790
        %v1108 = vmul.f32 %v1098, %v794
        %v1109 = vmul.f32 %v1098, %v798
        %v1110 = vmul.f32 %v1098, %v802
        %v1111 = vmul.f32 %v1098, %v806
        %v1112 = vmul.f32 %v1098, %v810
        %v1113 = vmul.f32 %v1098, %v814
        %v1114 = vmul.f32 %v1098, %v818
        %v1115 = vadd.f32 %v1099, %v1107
        %v1116 = vadd.f32 %v1100, %v1108
        %v1117 = vadd.f32 %v1101, %v1109
        %v1118 = vadd.f32 %v1102, %v1110
        %v1119 = vadd.f32 %v1103, %v1111
        %v1120 = vadd.f32 %v1104, %v1112
        %v1121 = vadd.f32 %v1105, %v1113
        %v1122 = vadd.f32 %v1106, %v1114
        %v1123 = vld [vmem:[%s640] sm:$0xff]
        %v1124 = vld [vmem:[%s640 + $0x8] sm:$0xff]
        %v1125 = vld [vmem:[%s640 + $0x10] sm:$0xff]
        %v1126 = vld [vmem:[%s640 + $0x18] sm:$0xff]
        %v1127 = vld [vmem:[%s640 + $0x20] sm:$0xff]
        %v1128 = vld [vmem:[%s640 + $0x28] sm:$0xff]
        %v1129 = vld [vmem:[%s640 + $0x30] sm:$0xff]
        %v1130 = vld [vmem:[%s640 + $0x38] sm:$0xff]
        %v1131 = vadd.f32 %v1123, %v1115
        %v1132 = vadd.f32 %v1124, %v1116
        %v1133 = vadd.f32 %v1125, %v1117
        %v1134 = vadd.f32 %v1126, %v1118
        %v1135 = vadd.f32 %v1127, %v1119
        %v1136 = vadd.f32 %v1128, %v1120
        %v1137 = vadd.f32 %v1129, %v1121
        %v1138 = vadd.f32 %v1130, %v1122
        %v1139 = vtanh.pop %v1131
        %v1140 = vtanh.pop %v1132
        %v1141 = vtanh.pop %v1133
        %v1142 = vtanh.pop %v1134
        %v1143 = vtanh.pop %v1135
        %v1144 = vtanh.pop %v1136
        %v1145 = vtanh.pop %v1137
        %v1146 = vtanh.pop %v1138
        %v1147 = vmul.f32 %v1139, 0.5
        %v1148 = vmul.f32 %v1140, 0.5
        %v1149 = vadd.f32 %v1147, 0.5
        %v1150 = vadd.f32 %v1148, 0.5
        %v1151 = vmul.f32 %v1141, 0.5
        %v1152 = vmul.f32 %v1142, 0.5
        %v1153 = vadd.f32 %v1151, 0.5
        %v1154 = vadd.f32 %v1152, 0.5
        %v1155 = vmul.f32 %v1145, 0.5
        %v1156 = vmul.f32 %v1146, 0.5
        %v1157 = vadd.f32 %v1155, 0.5
        %v1158 = vadd.f32 %v1156, 0.5
        %v1159 = vmul.f32 %v1153, %v1093
        %v1160 = vmul.f32 %v1154, %v1094
        %v1161 = vmul.f32 %v1149, %v1143
        %v1162 = vmul.f32 %v1150, %v1144
        %v1163 = vadd.f32 %v1159, %v1161
        %v1164 = vadd.f32 %v1160, %v1162
        %v1165 = vtanh.pop %v1163
        %v1166 = vtanh.pop %v1164
        %v1167 = vmul.f32 %v1157, %v1165
        %v1168 = vmul.f32 %v1158, %v1166
        %v1169 = vmul.f32 %v1167, %v742
        %v1170 = vmul.f32 %v1167, %v746
        %v1171 = vmul.f32 %v1167, %v750
        %v1172 = vmul.f32 %v1167, %v754
        %v1173 = vmul.f32 %v1167, %v758
        %v1174 = vmul.f32 %v1167, %v762
        %v1175 = vmul.f32 %v1167, %v766
        %v1176 = vmul.f32 %v1167, %v770
        %v1177 = vmul.f32 %v1168, %v790
        %v1178 = vmul.f32 %v1168, %v794
        %v1179 = vmul.f32 %v1168, %v798
        %v1180 = vmul.f32 %v1168, %v802
        %v1181 = vmul.f32 %v1168, %v806
        %v1182 = vmul.f32 %v1168, %v810
        %v1183 = vmul.f32 %v1168, %v814
        %v1184 = vmul.f32 %v1168, %v818
        %v1185 = vadd.f32 %v1169, %v1177
        %v1186 = vadd.f32 %v1170, %v1178
        %v1187 = vadd.f32 %v1171, %v1179
        %v1188 = vadd.f32 %v1172, %v1180
        %v1189 = vadd.f32 %v1173, %v1181
        %v1190 = vadd.f32 %v1174, %v1182
        %v1191 = vadd.f32 %v1175, %v1183
        %v1192 = vadd.f32 %v1176, %v1184
        %v1193 = vld [vmem:[%s670] sm:$0xff]
        %v1194 = vld [vmem:[%s670 + $0x8] sm:$0xff]
        %v1195 = vld [vmem:[%s670 + $0x10] sm:$0xff]
        %v1196 = vld [vmem:[%s670 + $0x18] sm:$0xff]
        %v1197 = vld [vmem:[%s670 + $0x20] sm:$0xff]
        %v1198 = vld [vmem:[%s670 + $0x28] sm:$0xff]
        %v1199 = vld [vmem:[%s670 + $0x30] sm:$0xff]
        %v1200 = vld [vmem:[%s670 + $0x38] sm:$0xff]
        %v1201 = vadd.f32 %v1193, %v1185
        %v1202 = vadd.f32 %v1194, %v1186
        %v1203 = vadd.f32 %v1195, %v1187
        %v1204 = vadd.f32 %v1196, %v1188
        %v1205 = vadd.f32 %v1197, %v1189
        %v1206 = vadd.f32 %v1198, %v1190
        %v1207 = vadd.f32 %v1199, %v1191
        %v1208 = vadd.f32 %v1200, %v1192
        %v1209 = vtanh.pop %v1201
        %v1210 = vtanh.pop %v1202
        %v1211 = vtanh.pop %v1203
        %v1212 = vtanh.pop %v1204
        %v1213 = vtanh.pop %v1205
        %v1214 = vtanh.pop %v1206
        %v1215 = vtanh.pop %v1207
        %v1216 = vtanh.pop %v1208
        %v1217 = vmul.f32 %v1209, 0.5
        %v1218 = vmul.f32 %v1210, 0.5
        %v1219 = vadd.f32 %v1217, 0.5
        %v1220 = vadd.f32 %v1218, 0.5
        %v1221 = vmul.f32 %v1211, 0.5
        %v1222 = vmul.f32 %v1212, 0.5
        %v1223 = vadd.f32 %v1221, 0.5
        %v1224 = vadd.f32 %v1222, 0.5
        %v1225 = vmul.f32 %v1215, 0.5
        %v1226 = vmul.f32 %v1216, 0.5
        %v1227 = vadd.f32 %v1225, 0.5
        %v1228 = vadd.f32 %v1226, 0.5
        %v1229 = vmul.f32 %v1223, %v1163
        %v1230 = vmul.f32 %v1224, %v1164
        %v1231 = vmul.f32 %v1219, %v1213
        %v1232 = vmul.f32 %v1220, %v1214
        %v1233 = vadd.f32 %v1229, %v1231
        %v1234 = vadd.f32 %v1230, %v1232
        %v1235 = vtanh.pop %v1233
        %v1236 = vtanh.pop %v1234
        %v1237 = vmul.f32 %v1227, %v1235
        %v1238 = vmul.f32 %v1228, %v1236
        %v1239 = vmul.f32 %v1237, %v742
        %v1240 = vmul.f32 %v1237, %v746
        %v1241 = vmul.f32 %v1237, %v750
        %v1242 = vmul.f32 %v1237, %v754
        %v1243 = vmul.f32 %v1237, %v758
        %v1244 = vmul.f32 %v1237, %v762
        %v1245 = vmul.f32 %v1237, %v766
        %v1246 = vmul.f32 %v1237, %v770
        %v1247 = vmul.f32 %v1238, %v790
        %v1248 = vmul.f32 %v1238, %v794
        %v1249 = vmul.f32 %v1238, %v798
        %v1250 = vmul.f32 %v1238, %v802
        %v1251 = vmul.f32 %v1238, %v806
        %v1252 = vmul.f32 %v1238, %v810
        %v1253 = vmul.f32 %v1238, %v814
        %v1254 = vmul.f32 %v1238, %v818
        %v1255 = vadd.f32 %v1239, %v1247
        %v1256 = vadd.f32 %v1240, %v1248
        %v1257 = vadd.f32 %v1241, %v1249
        %v1258 = vadd.f32 %v1242, %v1250
        %v1259 = vadd.f32 %v1243, %v1251
        %v1260 = vadd.f32 %v1244, %v1252
        %v1261 = vadd.f32 %v1245, %v1253
        %v1262 = vadd.f32 %v1246, %v1254
        %v1263 = vld [vmem:[%s700] sm:$0xff]
        %v1264 = vld [vmem:[%s700 + $0x8] sm:$0xff]
        %v1265 = vld [vmem:[%s700 + $0x10] sm:$0xff]
        %v1266 = vld [vmem:[%s700 + $0x18] sm:$0xff]
        %v1267 = vld [vmem:[%s700 + $0x20] sm:$0xff]
        %v1268 = vld [vmem:[%s700 + $0x28] sm:$0xff]
        %v1269 = vld [vmem:[%s700 + $0x30] sm:$0xff]
        %v1270 = vld [vmem:[%s700 + $0x38] sm:$0xff]
        %v1271 = vadd.f32 %v1263, %v1255
        %v1272 = vadd.f32 %v1264, %v1256
        %v1273 = vadd.f32 %v1265, %v1257
        %v1274 = vadd.f32 %v1266, %v1258
        %v1275 = vadd.f32 %v1267, %v1259
        %v1276 = vadd.f32 %v1268, %v1260
        %v1277 = vadd.f32 %v1269, %v1261
        %v1278 = vadd.f32 %v1270, %v1262
        %v1279 = vtanh.pop %v1271
        %v1280 = vtanh.pop %v1272
        %v1281 = vtanh.pop %v1273
        %v1282 = vtanh.pop %v1274
        %v1283 = vtanh.pop %v1275
        %v1284 = vtanh.pop %v1276
        %v1285 = vtanh.pop %v1277
        %v1286 = vtanh.pop %v1278
        %v1287 = vmul.f32 %v1279, 0.5
        %v1288 = vmul.f32 %v1280, 0.5
        %v1289 = vadd.f32 %v1287, 0.5
        %v1290 = vadd.f32 %v1288, 0.5
        %v1291 = vmul.f32 %v1281, 0.5
        %v1292 = vmul.f32 %v1282, 0.5
        %v1293 = vadd.f32 %v1291, 0.5
        %v1294 = vadd.f32 %v1292, 0.5
        %v1295 = vmul.f32 %v1285, 0.5
        %v1296 = vmul.f32 %v1286, 0.5
        %v1297 = vadd.f32 %v1295, 0.5
        %v1298 = vadd.f32 %v1296, 0.5
        %v1299 = vmul.f32 %v1293, %v1233
        %v1300 = vmul.f32 %v1294, %v1234
        %v1301 = vmul.f32 %v1289, %v1283
        %v1302 = vmul.f32 %v1290, %v1284
        %v1303 = vadd.f32 %v1299, %v1301
        %v1304 = vadd.f32 %v1300, %v1302
        %v1305 = vtanh.pop %v1303
        %v1306 = vtanh.pop %v1304
        %v1307 = vmul.f32 %v1297, %v1305
        %v1308 = vmul.f32 %v1298, %v1306
        %v1309 = vmul.f32 %v1307, %v742
        %v1310 = vmul.f32 %v1307, %v746
        %v1311 = vmul.f32 %v1307, %v750
        %v1312 = vmul.f32 %v1307, %v754
        %v1313 = vmul.f32 %v1307, %v758
        %v1314 = vmul.f32 %v1307, %v762
        %v1315 = vmul.f32 %v1307, %v766
        %v1316 = vmul.f32 %v1307, %v770
        %v1317 = vmul.f32 %v1308, %v790
        %v1318 = vmul.f32 %v1308, %v794
        %v1319 = vmul.f32 %v1308, %v798
        %v1320 = vmul.f32 %v1308, %v802
        %v1321 = vmul.f32 %v1308, %v806
        %v1322 = vmul.f32 %v1308, %v810
        %v1323 = vmul.f32 %v1308, %v814
        %v1324 = vmul.f32 %v1308, %v818
        %v1325 = vadd.f32 %v1309, %v1317
        %v1326 = vadd.f32 %v1310, %v1318
        %v1327 = vadd.f32 %v1311, %v1319
        %v1328 = vadd.f32 %v1312, %v1320
        %v1329 = vadd.f32 %v1313, %v1321
        %v1330 = vadd.f32 %v1314, %v1322
        %v1331 = vadd.f32 %v1315, %v1323
        %v1332 = vadd.f32 %v1316, %v1324
        %v1333 = vld [vmem:[%s730] sm:$0xff]
        %v1334 = vld [vmem:[%s730 + $0x8] sm:$0xff]
        %v1335 = vld [vmem:[%s730 + $0x10] sm:$0xff]
        %v1336 = vld [vmem:[%s730 + $0x18] sm:$0xff]
        %v1337 = vld [vmem:[%s730 + $0x20] sm:$0xff]
        %v1338 = vld [vmem:[%s730 + $0x28] sm:$0xff]
        %v1339 = vld [vmem:[%s730 + $0x30] sm:$0xff]
        %v1340 = vld [vmem:[%s730 + $0x38] sm:$0xff]
        %v1341 = vadd.f32 %v1333, %v1325
        %v1342 = vadd.f32 %v1334, %v1326
        %v1343 = vadd.f32 %v1335, %v1327
        %v1344 = vadd.f32 %v1336, %v1328
        %v1345 = vadd.f32 %v1337, %v1329
        %v1346 = vadd.f32 %v1338, %v1330
        %v1347 = vadd.f32 %v1339, %v1331
        %v1348 = vadd.f32 %v1340, %v1332
        %v1349 = vtanh.pop %v1341
        %v1350 = vtanh.pop %v1342
        %v1351 = vtanh.pop %v1343
        %v1352 = vtanh.pop %v1344
        %v1353 = vtanh.pop %v1345
        %v1354 = vtanh.pop %v1346
        %v1355 = vtanh.pop %v1347
        %v1356 = vtanh.pop %v1348
        %v1357 = vmul.f32 %v1349, 0.5
        %v1358 = vmul.f32 %v1350, 0.5
        %v1359 = vadd.f32 %v1357, 0.5
        %v1360 = vadd.f32 %v1358, 0.5
        %v1361 = vmul.f32 %v1351, 0.5
        %v1362 = vmul.f32 %v1352, 0.5
        %v1363 = vadd.f32 %v1361, 0.5
        %v1364 = vadd.f32 %v1362, 0.5
        %v1365 = vmul.f32 %v1355, 0.5
        %v1366 = vmul.f32 %v1356, 0.5
        %v1367 = vadd.f32 %v1365, 0.5
        %v1368 = vadd.f32 %v1366, 0.5
        %v1369 = vmul.f32 %v1363, %v1303
        %v1370 = vmul.f32 %v1364, %v1304
        %v1371 = vmul.f32 %v1359, %v1353
        %v1372 = vmul.f32 %v1360, %v1354
        %v1373 = vadd.f32 %v1369, %v1371
        %v1374 = vadd.f32 %v1370, %v1372
        %v1375 = vtanh.pop %v1373
        %v1376 = vtanh.pop %v1374
        %v1377 = vmul.f32 %v1367, %v1375
        %v1378 = vmul.f32 %v1368, %v1376
        %v1379 = vmax.f32 %v1377, 0.0
        %v1380 = vmax.f32 %v1378, 0.0
        %v1381 = vlaneseq
        %v1382 = vshrl.u32 %v1381, 7
        %v1383 = vsub.s32 0, %v1382
        %v1384 = vrot.slane %v208, %v1383
        %v1385 = vmul.f32 %v1379, %v1384
        %v1386 = vlaneseq
        %v1387 = vshrl.u32 %v1386, 7
        %v1388 = vsub.s32 1, %v1387
        %v1389 = vrot.slane %v208, %v1388
        %v1390 = vmul.f32 %v1380, %v1389
        %v1391 = vadd.f32 %v1385, %v1390
        %v1392 = vlaneseq
        %v1393 = vshrl.u32 %v1392, 7
        %v1394 = vsub.s32 0, %v1393
        %v1395 = vrot.slane %v209, %v1394
        %v1396 = vadd.f32 %v1391, %v1395
        %v1397 = vmax.f32 %v1396, 0.0
        %v1398 = vlaneseq
        %v1399 = vshrl.u32 %v1398, 7
        %v1400 = vsub.s32 0, %v1399
        %v1401 = vrot.slane %v210, %v1400
        %v1402 = vmul.f32 %v1397, %v1401
        %1403 = vadd.xlane.f32.xlu0 %v1402
        %v1404 = vpop.xlane.xlu0 %1403
        %v1405 = vlaneseq
        %v1406 = vshrl.u32 %v1405, 7
        %v1407 = vsub.s32 0, %v1406
        %v1408 = vrot.slane %v211, %v1407
        %v1409 = vadd.f32 %v1404, %v1408
        %vm1410 = vcmask 7168
        %1411 = vst.msk [vmem:[%s203] sm:$0xff] %vm1410, %v1409
        %p1412 = scmp.lt.s32.totalorder %s13, 1
        %s1413 = scalar_select %p1412, %s13, 1
        %s1414 = smul.addr %s1413, 8
        %s1415 = scalar_lea.vmem %s2, %s1414
        // Predicated region
        $region67: #{tpu_custom_call.1} parent=61 // pred_check
          %p1416 = pneg %p78
        $region68: #{tpu_custom_call.1} parent=61 // pred_check_branch
          %1418 = sbr.rel (%p1416) target = $region70
        $region69: #{tpu_custom_call.1} parent=61 // pred_region
          _
        $region70: #{tpu_custom_call.1} parent=61 // pred_fallthru
          _
      $region62: #{tpu_custom_call.1} parent=5 // pred_fallthru
        _
      %p1419 = scmp.le.s32.totalorder 2, %s8
      // Predicated region
      $region71: #{tpu_custom_call.1} parent=5 // pred_check
        %p1420 = pneg %p1419
      $region72: #{tpu_custom_call.1} parent=5 // pred_check_branch
        %1422 = sbr.rel (%p1420) target = $region74
      $region73: #{tpu_custom_call.1} parent=5 // pred_region
        %s1423 = ssub.s32 %s8, 2
        // Predicated region
        $region75: #{tpu_custom_call.1} parent=73 // pred_check
          %p1424 = pneg %p84
        $region76: #{tpu_custom_call.1} parent=73 // pred_check_branch
          %1426 = sbr.rel (%p1424) target = $region78
        $region77: #{tpu_custom_call.1} parent=73 // pred_region
          %p1427 = scmp.lt.s32.totalorder %s14, 1
          %s1428 = scalar_select %p1427, %s14, 1
          %s1429 = smul.addr %s1428, 8
          %s1430 = scalar_lea.vmem %s2, %s1429
        $region78: #{tpu_custom_call.1} parent=73 // pred_fallthru
          _
      $region74: #{tpu_custom_call.1} parent=5 // pred_fallthru
        _
    $region6: #{tpu_custom_call.1} parent=1 // loop_footer
      %s12 = sadd.s32 1, %s8
    $region7: #{tpu_custom_call.1} parent=1 // loop_footer_branch
      %7 = sbr.rel target = $region3
    $region8: #{tpu_custom_call.1} parent=1 // loop_exit
      _

</llo_original>
